<compile_context>
chip_gen: v7x
topology: tpu7x:2x2x1
jax: 0.10.0
libtpu: 0.0.40
codegen_flags: <defaults>
</compile_context>

<pallas_src>
import jax
import jax.numpy as jnp
from jax.experimental import pallas as pl
from jax.experimental.pallas import tpu as pltpu


def _round_up(x, m):
    return (x + m - 1) // m * m


def encoder_kernel(x_ref, w1_ref, b1_ref, w2_ref, b2_ref, o_ref):
    # fc1: bf16 MXU operands (x already streamed as bf16), f32 accumulation;
    # bias add + ReLU stay f32 on the VPU (v5e VPU has no bf16).
    h = jnp.dot(x_ref[...], w1_ref[...], preferred_element_type=jnp.float32)
    h = jnp.maximum(h + b1_ref[...], 0.0)
    # fc2: bf16 MXU operands, f32 accumulation + bias. Output block is
    # lane-dense (latent padded to a multiple of 128) -> unmasked vst.
    y = jnp.dot(h.astype(jnp.bfloat16), w2_ref[...],
                preferred_element_type=jnp.float32)
    o_ref[...] = y + b2_ref[...]


def encoder_forward(x, w1, b1, w2, b2, *, tile_b=2048):
    """PyTorch-layout params:
         w1: (512, 784), b1: (512,), w2: (latent, 512), b2: (latent,)
       x: (B, ...) -> flattened to (B, 784). Returns (B, latent) float32."""
    B = x.shape[0]
    xf = x.reshape(B, -1)                      # torch.flatten(x, start_dim=1)
    if xf.dtype != jnp.bfloat16:
        xf = xf.astype(jnp.bfloat16)           # halve the dominant HBM stream
    in_dim = xf.shape[1]                       # 784
    hid = w1.shape[0]                          # 512
    latent = w2.shape[0]

    # Weights pre-transposed to (in, out) and cast once to bf16 for the MXU.
    w1_t = w1.T.astype(jnp.bfloat16)           # (784, 512)
    w2_t = w2.T.astype(jnp.bfloat16)           # (512, latent)
    b1r = b1.reshape(1, hid).astype(jnp.float32)
    b2r = b2.reshape(1, latent).astype(jnp.float32)

    # Pad the output (latent) dim to a multiple of 128 -> lane-dense stores.
    lat_p = max(_round_up(latent, 128), 128)
    if lat_p != latent:
        w2_t = jnp.pad(w2_t, ((0, 0), (0, lat_p - latent)))
        b2r = jnp.pad(b2r, ((0, 0), (0, lat_p - latent)))

    # Batch tiling: NO pad copy of x. tb is a multiple of 16 (bf16 sublanes);
    # the last grid tile may be ragged (Pallas masks the edge loads/stores).
    tb = min(tile_b, _round_up(B, 16))
    if B >= 512 and pl.cdiv(B, tb) < 2:
        # Ensure >=2 grid steps so v7x megacore sharding actually engages.
        tb = _round_up(pl.cdiv(B, 2), 16)
    grid = (pl.cdiv(B, tb),)

    out = pl.pallas_call(
        encoder_kernel,
        out_shape=jax.ShapeDtypeStruct((B, lat_p), jnp.float32),
        grid=grid,
        in_specs=[
            pl.BlockSpec((tb, in_dim), lambda i: (i, 0)),     # x tile (streams, bf16)
            pl.BlockSpec((in_dim, hid), lambda i: (0, 0)),    # w1 (resident)
            pl.BlockSpec((1, hid), lambda i: (0, 0)),         # b1 (resident)
            pl.BlockSpec((hid, lat_p), lambda i: (0, 0)),     # w2 (resident)
            pl.BlockSpec((1, lat_p), lambda i: (0, 0)),       # b2 (resident)
        ],
        out_specs=pl.BlockSpec((tb, lat_p), lambda i: (i, 0)),
        compiler_params=pltpu.CompilerParams(
            dimension_semantics=("parallel",),                # megacore on v7x
            vmem_limit_bytes=32 * 1024 * 1024,
        ),
    )(xf, w1_t, b1r, w2_t, b2r)

    return out[:, :latent]


def init_params(key, latent_dim):
    """Deterministic init with nn.Linear (out, in) weight layout."""
    k1, k2, k3, k4 = jax.random.split(key, 4)
    w1 = jax.random.normal(k1, (512, 784), jnp.float32) * 0.05
    b1 = jax.random.normal(k2, (512,), jnp.float32) * 0.05
    w2 = jax.random.normal(k3, (latent_dim, 512), jnp.float32) * 0.05
    b2 = jax.random.normal(k4, (latent_dim,), jnp.float32) * 0.05
    return w1, b1, w2, b2


if __name__ == "__main__":
    B, LATENT = 8, 32
    key = jax.random.PRNGKey(0)
    kx, kp = jax.random.split(key)
    x = jax.random.normal(kx, (B, 1, 28, 28), jnp.float32)   # MNIST-like input
    w1, b1, w2, b2 = init_params(kp, LATENT)

    out = encoder_forward(x, w1, b1, w2, b2)
    out = jax.block_until_ready(out)

    # Pure-JAX f32 reference of the Encoder forward pass.
    xf = x.reshape(B, -1)
    ref = jnp.maximum(xf @ w1.T + b1, 0.0) @ w2.T + b2

    assert out.shape == (B, LATENT), out.shape
    # Loosened tolerance: kernel uses bf16 MXU operands with f32 accumulation.
    assert jnp.allclose(out, ref, atol=5e-2, rtol=5e-2), (
        float(jnp.max(jnp.abs(out - ref))))
    print("KERNEL_OK")
</pallas_src>

<mosaic_0001>
module attributes {stable_mosaic.version = 11 : i64} {
  func.func @encoder_kernel(%arg0: i32, %arg1: memref<16x784xbf16, #tpu.memory_space<vmem>>, %arg2: memref<784x512xbf16, #tpu.memory_space<vmem>>, %arg3: memref<1x512xf32, #tpu.memory_space<vmem>>, %arg4: memref<512x128xbf16, #tpu.memory_space<vmem>>, %arg5: memref<1x128xf32, #tpu.memory_space<vmem>>, %arg6: memref<16x128xf32, #tpu.memory_space<vmem>>) attributes {dimension_semantics = [#tpu.dimension_semantics<parallel>], iteration_bounds = array<i64: 1>, scalar_prefetch = 0 : i64, scratch_operands = 0 : i64, tpu.core_type = #tpu.core_type<tc>, window_params = [{transform_indices = @transform_0, window_bounds = array<i64: 16, 784>}, {pipeline_mode = #tpu.pipeline_mode<synchronous>, transform_indices = @transform_1, window_bounds = array<i64: 784, 512>}, {pipeline_mode = #tpu.pipeline_mode<synchronous>, transform_indices = @transform_2, window_bounds = array<i64: 1, 512>}, {pipeline_mode = #tpu.pipeline_mode<synchronous>, transform_indices = @transform_3, window_bounds = array<i64: 512, 128>}, {pipeline_mode = #tpu.pipeline_mode<synchronous>, transform_indices = @transform_4, window_bounds = array<i64: 1, 128>}, {transform_indices = @transform_5, window_bounds = array<i64: 16, 128>}]} {
    %c0 = arith.constant 0 : index
    %c0_0 = arith.constant 0 : index
    %0 = vector.load %arg1[%c0, %c0_0] : memref<16x784xbf16, #tpu.memory_space<vmem>>, vector<16x784xbf16>
    %c0_1 = arith.constant 0 : index
    %c0_2 = arith.constant 0 : index
    %1 = vector.load %arg2[%c0_1, %c0_2] : memref<784x512xbf16, #tpu.memory_space<vmem>>, vector<784x512xbf16>
    %cst = arith.constant dense<0.000000e+00> : vector<16x512xf32>
    %2 = tpu.matmul %0, %1, %cst {dimension_numbers = #tpu.dot_dimension_numbers<[1], [0], [0], [1], [0, 0, 1, 1], [], []>} : vector<16x784xbf16>, vector<784x512xbf16>, vector<16x512xf32> -> vector<16x512xf32>
    %c0_3 = arith.constant 0 : index
    %c0_4 = arith.constant 0 : index
    %3 = vector.load %arg3[%c0_3, %c0_4] : memref<1x512xf32, #tpu.memory_space<vmem>>, vector<1x512xf32>
    %4 = vector.broadcast %3 : vector<1x512xf32> to vector<16x512xf32>
    %5 = arith.addf %2, %4 : vector<16x512xf32>
    %cst_5 = arith.constant 0.000000e+00 : f32
    %6 = vector.broadcast %cst_5 : f32 to vector<16x512xf32>
    %7 = arith.maximumf %5, %6 : vector<16x512xf32>
    %8 = arith.truncf %7 : vector<16x512xf32> to vector<16x512xbf16>
    %c0_6 = arith.constant 0 : index
    %c0_7 = arith.constant 0 : index
    %9 = vector.load %arg4[%c0_6, %c0_7] : memref<512x128xbf16, #tpu.memory_space<vmem>>, vector<512x128xbf16>
    %cst_8 = arith.constant dense<0.000000e+00> : vector<16x128xf32>
    %10 = tpu.matmul %8, %9, %cst_8 {dimension_numbers = #tpu.dot_dimension_numbers<[1], [0], [0], [1], [0, 0, 1, 1], [], []>} : vector<16x512xbf16>, vector<512x128xbf16>, vector<16x128xf32> -> vector<16x128xf32>
    %c0_9 = arith.constant 0 : index
    %c0_10 = arith.constant 0 : index
    %11 = vector.load %arg5[%c0_9, %c0_10] : memref<1x128xf32, #tpu.memory_space<vmem>>, vector<1x128xf32>
    %12 = vector.broadcast %11 : vector<1x128xf32> to vector<16x128xf32>
    %13 = arith.addf %10, %12 : vector<16x128xf32>
    %c0_11 = arith.constant 0 : index
    %c0_12 = arith.constant 0 : index
    %14 = vector.load %arg6[%c0_11, %c0_12] : memref<16x128xf32, #tpu.memory_space<vmem>>, vector<16x128xf32>
    tpu.vector_store %arg6[%c0_11, %c0_12], %13 {strides = array<i32>} : memref<16x128xf32, #tpu.memory_space<vmem>>, vector<16x128xf32>,
    return
  }
  func.func @transform_0(%arg0: i32) -> (i32, i32) {
    %c0_i32 = arith.constant 0 : i32
    %c0_i32_0 = arith.constant 0 : i32
    return %arg0, %c0_i32 : i32, i32
  }
  func.func @transform_1(%arg0: i32) -> (i32, i32) {
    %c0_i32 = arith.constant 0 : i32
    %c0_i32_0 = arith.constant 0 : i32
    %c0_i32_1 = arith.constant 0 : i32
    return %c0_i32, %c0_i32_0 : i32, i32
  }
  func.func @transform_2(%arg0: i32) -> (i32, i32) {
    %c0_i32 = arith.constant 0 : i32
    %c0_i32_0 = arith.constant 0 : i32
    %c0_i32_1 = arith.constant 0 : i32
    return %c0_i32, %c0_i32_0 : i32, i32
  }
  func.func @transform_3(%arg0: i32) -> (i32, i32) {
    %c0_i32 = arith.constant 0 : i32
    %c0_i32_0 = arith.constant 0 : i32
    %c0_i32_1 = arith.constant 0 : i32
    return %c0_i32, %c0_i32_0 : i32, i32
  }
  func.func @transform_4(%arg0: i32) -> (i32, i32) {
    %c0_i32 = arith.constant 0 : i32
    %c0_i32_0 = arith.constant 0 : i32
    %c0_i32_1 = arith.constant 0 : i32
    return %c0_i32, %c0_i32_0 : i32, i32
  }
  func.func @transform_5(%arg0: i32) -> (i32, i32) {
    %c0_i32 = arith.constant 0 : i32
    %c0_i32_0 = arith.constant 0 : i32
    return %arg0, %c0_i32 : i32, i32
  }
}

</mosaic_0001>

<llo_original>
// kernel: tpu_custom_call.1
$region0: #{tpu_custom_call.1}
  #allocation0 [shape = 'u32[]', space=smem, size = 0x4, offset = 0x4, fixed_abs, tag = 'smem constant byte address 0x4 - core index']
  #allocation1 [shape = 'u32[144,128]{1,0:T(1,128)}', space=vmem, size = 0x12000, scoped, tag = 'internal scratch']
  %s0 = inlined_call_operand.hbm [shape: bf16[8,784], index: 0, kind: input, shape index: {}]
  %s1 = inlined_call_operand.hbm [shape: bf16[784,512], index: 1, kind: input, shape index: {}]
  %s2 = inlined_call_operand.vmem [shape: f32[1,512], index: 2, kind: input, shape index: {}]
  %s3 = inlined_call_operand.hbm [shape: bf16[512,128], index: 3, kind: input, shape index: {}]
  %s4 = inlined_call_operand.vmem [shape: f32[1,128], index: 4, kind: input, shape index: {}]
  %s5 = inlined_call_operand.hbm [shape: f32[8,128], index: 5, kind: output, shape index: {}]
  %s6 = sld [smem:[#allocation0]]
  $region42: #{tpu_custom_call.1} parent=0
    _
  %s8 = ssub.s32 1, %s6
  %s9 = scalar_select 0, %s8, %s6
  $region1: #{tpu_custom_call.1} parent=0
    #allocation2 [shape = 'u8[28672]{0}', space=vmem, size = 0x7000, scoped, tag = 'input window, operand 0, single buffered']
    #allocation3 [shape = 's32[1]{0}', space=sflag, size = 0x4, scoped, tag = 'scoped memory for tpu_custom_call.1']
    #allocation4 [shape = 's32[1]{0}', space=sflag, size = 0x4, scoped, tag = 'scoped memory for tpu_custom_call.1']
    #allocation5 [shape = 'u8[802816]{0}', space=vmem, size = 0xc4000, scoped, tag = 'input window, operand 1, single buffered']
    #allocation6 [shape = 's32[1]{0}', space=sflag, size = 0x4, scoped, tag = 'scoped memory for tpu_custom_call.1']
    #allocation7 [shape = 'u8[131072]{0}', space=vmem, size = 0x20000, scoped, tag = 'input window, operand 3, single buffered']
    #allocation8 [shape = 'u8[8192]{0}', space=vmem, size = 0x2000, scoped, tag = 'output window, operand 0, single buffered']
    %10 = vsyncpa [#allocation3], 0
    %11 = vsyncpa [#allocation6], 0
    %12 = vsyncpa [#allocation4], 0
    // Predicated region
    $region2: #{tpu_custom_call.1} parent=1 // pred_check
      _
    $region3: #{tpu_custom_call.1} parent=1 // pred_check_branch
      %14 = sbr.rel (0) target = $region5
    $region4: #{tpu_custom_call.1} parent=1 // pred_region
      %s16 = ssub.s32 896, 448
      %17 = vsyncadd [#allocation3], %s16
      %s18 = sshll.u32 [#allocation2], 4
      %s19 = int_to_ptr.vmem [resolvable:$true] %s18
      %24 = dma.hbm_to_vmem [thread:$0]  %s0, 448, %s19, [#allocation3], 448, 448, 28
    $region5: #{tpu_custom_call.1} parent=1 // pred_fallthru
      _
    // Predicated region
    $region6: #{tpu_custom_call.1} parent=1 // pred_check
      _
    $region7: #{tpu_custom_call.1} parent=1 // pred_check_branch
      %26 = sbr.rel (0) target = $region9
    $region8: #{tpu_custom_call.1} parent=1 // pred_region
      %s28 = ssub.s32 25088, 25088
      %29 = vsyncadd [#allocation6], %s28
      %s30 = sshll.u32 [#allocation5], 4
      %s31 = int_to_ptr.vmem [resolvable:$true] %s30
      %36 = dma.hbm_to_vmem [thread:$0]  %s1, 25088, %s31, [#allocation6], 256, 256, 16
    $region9: #{tpu_custom_call.1} parent=1 // pred_fallthru
      _
    // Predicated region
    $region10: #{tpu_custom_call.1} parent=1 // pred_check
      _
    $region11: #{tpu_custom_call.1} parent=1 // pred_check_branch
      %38 = sbr.rel (0) target = $region13
    $region12: #{tpu_custom_call.1} parent=1 // pred_region
      _
    $region13: #{tpu_custom_call.1} parent=1 // pred_fallthru
      _
    // Predicated region
    $region14: #{tpu_custom_call.1} parent=1 // pred_check
      _
    $region15: #{tpu_custom_call.1} parent=1 // pred_check_branch
      %40 = sbr.rel (0) target = $region17
    $region16: #{tpu_custom_call.1} parent=1 // pred_region
      %s42 = ssub.s32 4096, 4096
      %43 = vsyncadd [#allocation6], %s42
      %s44 = sshll.u32 [#allocation7], 4
      %s45 = int_to_ptr.vmem [resolvable:$true] %s44
      %50 = dma.hbm_to_vmem [thread:$0]  %s3, 4096, %s45, [#allocation6], 64, 64, 4
    $region17: #{tpu_custom_call.1} parent=1 // pred_fallthru
      _
    // Predicated region
    $region18: #{tpu_custom_call.1} parent=1 // pred_check
      _
    $region19: #{tpu_custom_call.1} parent=1 // pred_check_branch
      %52 = sbr.rel (0) target = $region21
    $region20: #{tpu_custom_call.1} parent=1 // pred_region
      _
    $region21: #{tpu_custom_call.1} parent=1 // pred_fallthru
      _
    // Predicated region
    $region22: #{tpu_custom_call.1} parent=1 // pred_check
      _
    $region23: #{tpu_custom_call.1} parent=1 // pred_check_branch
      %54 = sbr.rel (0) target = $region25
    $region24: #{tpu_custom_call.1} parent=1 // pred_region
      %55 = dma.done [#allocation3], 896
    $region25: #{tpu_custom_call.1} parent=1 // pred_fallthru
      _
    // Predicated region
    $region26: #{tpu_custom_call.1} parent=1 // pred_check
      _
    $region27: #{tpu_custom_call.1} parent=1 // pred_check_branch
      %57 = sbr.rel (0) target = $region29
    $region28: #{tpu_custom_call.1} parent=1 // pred_region
      %58 = dma.done [#allocation6], 25088
    $region29: #{tpu_custom_call.1} parent=1 // pred_fallthru
      _
    // Predicated region
    $region30: #{tpu_custom_call.1} parent=1 // pred_check
      _
    $region31: #{tpu_custom_call.1} parent=1 // pred_check_branch
      %60 = sbr.rel (0) target = $region33
    $region32: #{tpu_custom_call.1} parent=1 // pred_region
      %61 = dma.done [#allocation6], 4096
    $region33: #{tpu_custom_call.1} parent=1 // pred_fallthru
      _
    %v63 = vld [vmem:[#allocation2] sm:$0xff]
    %v64 = vld [vmem:[#allocation2 + $0x8] sm:$0xff]
    %v65 = vld [vmem:[#allocation2 + $0x10] sm:$0xff]
    %v66 = vld [vmem:[#allocation2 + $0x18] sm:$0xf]
    %v67 = vld [vmem:[#allocation2 + $0x1c] sm:$0xff]
    %v68 = vld [vmem:[#allocation2 + $0x24] sm:$0xff]
    %v69 = vld [vmem:[#allocation2 + $0x2c] sm:$0xff]
    %v70 = vld [vmem:[#allocation2 + $0x34] sm:$0xf]
    %v71 = vld [vmem:[#allocation5] sm:$0xff]
    %v72 = vld [vmem:[#allocation5 + $0x8] sm:$0xff]
    %v73 = vld [vmem:[#allocation5 + $0x10] sm:$0xff]
    %v74 = vld [vmem:[#allocation5 + $0x18] sm:$0xff]
    %v75 = vld [vmem:[#allocation5 + $0x20] sm:$0xff]
    %v76 = vld [vmem:[#allocation5 + $0x28] sm:$0xff]
    %v77 = vld [vmem:[#allocation5 + $0x30] sm:$0xff]
    %v78 = vld [vmem:[#allocation5 + $0x38] sm:$0xff]
    %v79 = vld [vmem:[#allocation5 + $0x40] sm:$0xff]
    %v80 = vld [vmem:[#allocation5 + $0x48] sm:$0xff]
    %v81 = vld [vmem:[#allocation5 + $0x50] sm:$0xff]
    %v82 = vld [vmem:[#allocation5 + $0x58] sm:$0xff]
    %v83 = vld [vmem:[#allocation5 + $0x60] sm:$0xff]
    %v84 = vld [vmem:[#allocation5 + $0x68] sm:$0xff]
    %v85 = vld [vmem:[#allocation5 + $0x70] sm:$0xff]
    %v86 = vld [vmem:[#allocation5 + $0x78] sm:$0xff]
    %v87 = vld [vmem:[#allocation5 + $0x80] sm:$0xff]
    %v88 = vld [vmem:[#allocation5 + $0x88] sm:$0xff]
    %v89 = vld [vmem:[#allocation5 + $0x90] sm:$0xff]
    %v90 = vld [vmem:[#allocation5 + $0x98] sm:$0xff]
    %v91 = vld [vmem:[#allocation5 + $0xa0] sm:$0xff]
    %v92 = vld [vmem:[#allocation5 + $0xa8] sm:$0xff]
    %v93 = vld [vmem:[#allocation5 + $0xb0] sm:$0xff]
    %v94 = vld [vmem:[#allocation5 + $0xb8] sm:$0xff]
    %v95 = vld [vmem:[#allocation5 + $0xc0] sm:$0xff]
    %v96 = vld [vmem:[#allocation5 + $0xc8] sm:$0xff]
    %v97 = vld [vmem:[#allocation5 + $0xd0] sm:$0xff]
    %v98 = vld [vmem:[#allocation5 + $0xd8] sm:$0xff]
    %v99 = vld [vmem:[#allocation5 + $0xe0] sm:$0xff]
    %v100 = vld [vmem:[#allocation5 + $0xe8] sm:$0xff]
    %v101 = vld [vmem:[#allocation5 + $0xf0] sm:$0xff]
    %v102 = vld [vmem:[#allocation5 + $0xf8] sm:$0xff]
    %v103 = vld [vmem:[#allocation5 + $0x100] sm:$0xff]
    %v104 = vld [vmem:[#allocation5 + $0x108] sm:$0xff]
    %v105 = vld [vmem:[#allocation5 + $0x110] sm:$0xff]
    %v106 = vld [vmem:[#allocation5 + $0x118] sm:$0xff]
    %v107 = vld [vmem:[#allocation5 + $0x120] sm:$0xff]
    %v108 = vld [vmem:[#allocation5 + $0x128] sm:$0xff]
    %v109 = vld [vmem:[#allocation5 + $0x130] sm:$0xff]
    %v110 = vld [vmem:[#allocation5 + $0x138] sm:$0xff]
    %v111 = vld [vmem:[#allocation5 + $0x140] sm:$0xff]
    %v112 = vld [vmem:[#allocation5 + $0x148] sm:$0xff]
    %v113 = vld [vmem:[#allocation5 + $0x150] sm:$0xff]
    %v114 = vld [vmem:[#allocation5 + $0x158] sm:$0xff]
    %v115 = vld [vmem:[#allocation5 + $0x160] sm:$0xff]
    %v116 = vld [vmem:[#allocation5 + $0x168] sm:$0xff]
    %v117 = vld [vmem:[#allocation5 + $0x170] sm:$0xff]
    %v118 = vld [vmem:[#allocation5 + $0x178] sm:$0xff]
    %v119 = vld [vmem:[#allocation5 + $0x180] sm:$0xff]
    %v120 = vld [vmem:[#allocation5 + $0x188] sm:$0xff]
    %v121 = vld [vmem:[#allocation5 + $0x190] sm:$0xff]
    %v122 = vld [vmem:[#allocation5 + $0x198] sm:$0xff]
    %v123 = vld [vmem:[#allocation5 + $0x1a0] sm:$0xff]
    %v124 = vld [vmem:[#allocation5 + $0x1a8] sm:$0xff]
    %v125 = vld [vmem:[#allocation5 + $0x1b0] sm:$0xff]
    %v126 = vld [vmem:[#allocation5 + $0x1b8] sm:$0xff]
    %v127 = vld [vmem:[#allocation5 + $0x1c0] sm:$0xff]
    %v128 = vld [vmem:[#allocation5 + $0x1c8] sm:$0xff]
    %v129 = vld [vmem:[#allocation5 + $0x1d0] sm:$0xff]
    %v130 = vld [vmem:[#allocation5 + $0x1d8] sm:$0xff]
    %v131 = vld [vmem:[#allocation5 + $0x1e0] sm:$0xff]
    %v132 = vld [vmem:[#allocation5 + $0x1e8] sm:$0xff]
    %v133 = vld [vmem:[#allocation5 + $0x1f0] sm:$0xff]
    %v134 = vld [vmem:[#allocation5 + $0x1f8] sm:$0xff]
    %v135 = vld [vmem:[#allocation5 + $0x200] sm:$0xff]
    %v136 = vld [vmem:[#allocation5 + $0x208] sm:$0xff]
    %v137 = vld [vmem:[#allocation5 + $0x210] sm:$0xff]
    %v138 = vld [vmem:[#allocation5 + $0x218] sm:$0xff]
    %v139 = vld [vmem:[#allocation5 + $0x220] sm:$0xff]
    %v140 = vld [vmem:[#allocation5 + $0x228] sm:$0xff]
    %v141 = vld [vmem:[#allocation5 + $0x230] sm:$0xff]
    %v142 = vld [vmem:[#allocation5 + $0x238] sm:$0xff]
    %v143 = vld [vmem:[#allocation5 + $0x240] sm:$0xff]
    %v144 = vld [vmem:[#allocation5 + $0x248] sm:$0xff]
    %v145 = vld [vmem:[#allocation5 + $0x250] sm:$0xff]
    %v146 = vld [vmem:[#allocation5 + $0x258] sm:$0xff]
    %v147 = vld [vmem:[#allocation5 + $0x260] sm:$0xff]
    %v148 = vld [vmem:[#allocation5 + $0x268] sm:$0xff]
    %v149 = vld [vmem:[#allocation5 + $0x270] sm:$0xff]
    %v150 = vld [vmem:[#allocation5 + $0x278] sm:$0xff]
    %v151 = vld [vmem:[#allocation5 + $0x280] sm:$0xff]
    %v152 = vld [vmem:[#allocation5 + $0x288] sm:$0xff]
    %v153 = vld [vmem:[#allocation5 + $0x290] sm:$0xff]
    %v154 = vld [vmem:[#allocation5 + $0x298] sm:$0xff]
    %v155 = vld [vmem:[#allocation5 + $0x2a0] sm:$0xff]
    %v156 = vld [vmem:[#allocation5 + $0x2a8] sm:$0xff]
    %v157 = vld [vmem:[#allocation5 + $0x2b0] sm:$0xff]
    %v158 = vld [vmem:[#allocation5 + $0x2b8] sm:$0xff]
    %v159 = vld [vmem:[#allocation5 + $0x2c0] sm:$0xff]
    %v160 = vld [vmem:[#allocation5 + $0x2c8] sm:$0xff]
    %v161 = vld [vmem:[#allocation5 + $0x2d0] sm:$0xff]
    %v162 = vld [vmem:[#allocation5 + $0x2d8] sm:$0xff]
    %v163 = vld [vmem:[#allocation5 + $0x2e0] sm:$0xff]
    %v164 = vld [vmem:[#allocation5 + $0x2e8] sm:$0xff]
    %v165 = vld [vmem:[#allocation5 + $0x2f0] sm:$0xff]
    %v166 = vld [vmem:[#allocation5 + $0x2f8] sm:$0xff]
    %v167 = vld [vmem:[#allocation5 + $0x300] sm:$0xff]
    %v168 = vld [vmem:[#allocation5 + $0x308] sm:$0xff]
    %v169 = vld [vmem:[#allocation5 + $0x310] sm:$0xff]
    %v170 = vld [vmem:[#allocation5 + $0x318] sm:$0xff]
    %v171 = vld [vmem:[#allocation5 + $0x320] sm:$0xff]
    %v172 = vld [vmem:[#allocation5 + $0x328] sm:$0xff]
    %v173 = vld [vmem:[#allocation5 + $0x330] sm:$0xff]
    %v174 = vld [vmem:[#allocation5 + $0x338] sm:$0xff]
    %v175 = vld [vmem:[#allocation5 + $0x340] sm:$0xff]
    %v176 = vld [vmem:[#allocation5 + $0x348] sm:$0xff]
    %v177 = vld [vmem:[#allocation5 + $0x350] sm:$0xff]
    %v178 = vld [vmem:[#allocation5 + $0x358] sm:$0xff]
    %v179 = vld [vmem:[#allocation5 + $0x360] sm:$0xff]
    %v180 = vld [vmem:[#allocation5 + $0x368] sm:$0xff]
    %v181 = vld [vmem:[#allocation5 + $0x370] sm:$0xff]
    %v182 = vld [vmem:[#allocation5 + $0x378] sm:$0xff]
    %v183 = vld [vmem:[#allocation5 + $0x380] sm:$0xff]
    %v184 = vld [vmem:[#allocation5 + $0x388] sm:$0xff]
    %v185 = vld [vmem:[#allocation5 + $0x390] sm:$0xff]
    %v186 = vld [vmem:[#allocation5 + $0x398] sm:$0xff]
    %v187 = vld [vmem:[#allocation5 + $0x3a0] sm:$0xff]
    %v188 = vld [vmem:[#allocation5 + $0x3a8] sm:$0xff]
    %v189 = vld [vmem:[#allocation5 + $0x3b0] sm:$0xff]
    %v190 = vld [vmem:[#allocation5 + $0x3b8] sm:$0xff]
    %v191 = vld [vmem:[#allocation5 + $0x3c0] sm:$0xff]
    %v192 = vld [vmem:[#allocation5 + $0x3c8] sm:$0xff]
    %v193 = vld [vmem:[#allocation5 + $0x3d0] sm:$0xff]
    %v194 = vld [vmem:[#allocation5 + $0x3d8] sm:$0xff]
    %v195 = vld [vmem:[#allocation5 + $0x3e0] sm:$0xff]
    %v196 = vld [vmem:[#allocation5 + $0x3e8] sm:$0xff]
    %v197 = vld [vmem:[#allocation5 + $0x3f0] sm:$0xff]
    %v198 = vld [vmem:[#allocation5 + $0x3f8] sm:$0xff]
    %v199 = vld [vmem:[#allocation5 + $0x400] sm:$0xff]
    %v200 = vld [vmem:[#allocation5 + $0x408] sm:$0xff]
    %v201 = vld [vmem:[#allocation5 + $0x410] sm:$0xff]
    %v202 = vld [vmem:[#allocation5 + $0x418] sm:$0xff]
    %v203 = vld [vmem:[#allocation5 + $0x420] sm:$0xff]
    %v204 = vld [vmem:[#allocation5 + $0x428] sm:$0xff]
    %v205 = vld [vmem:[#allocation5 + $0x430] sm:$0xff]
    %v206 = vld [vmem:[#allocation5 + $0x438] sm:$0xff]
    %v207 = vld [vmem:[#allocation5 + $0x440] sm:$0xff]
    %v208 = vld [vmem:[#allocation5 + $0x448] sm:$0xff]
    %v209 = vld [vmem:[#allocation5 + $0x450] sm:$0xff]
    %v210 = vld [vmem:[#allocation5 + $0x458] sm:$0xff]
    %v211 = vld [vmem:[#allocation5 + $0x460] sm:$0xff]
    %v212 = vld [vmem:[#allocation5 + $0x468] sm:$0xff]
    %v213 = vld [vmem:[#allocation5 + $0x470] sm:$0xff]
    %v214 = vld [vmem:[#allocation5 + $0x478] sm:$0xff]
    %v215 = vld [vmem:[#allocation5 + $0x480] sm:$0xff]
    %v216 = vld [vmem:[#allocation5 + $0x488] sm:$0xff]
    %v217 = vld [vmem:[#allocation5 + $0x490] sm:$0xff]
    %v218 = vld [vmem:[#allocation5 + $0x498] sm:$0xff]
    %v219 = vld [vmem:[#allocation5 + $0x4a0] sm:$0xff]
    %v220 = vld [vmem:[#allocation5 + $0x4a8] sm:$0xff]
    %v221 = vld [vmem:[#allocation5 + $0x4b0] sm:$0xff]
    %v222 = vld [vmem:[#allocation5 + $0x4b8] sm:$0xff]
    %v223 = vld [vmem:[#allocation5 + $0x4c0] sm:$0xff]
    %v224 = vld [vmem:[#allocation5 + $0x4c8] sm:$0xff]
    %v225 = vld [vmem:[#allocation5 + $0x4d0] sm:$0xff]
    %v226 = vld [vmem:[#allocation5 + $0x4d8] sm:$0xff]
    %v227 = vld [vmem:[#allocation5 + $0x4e0] sm:$0xff]
    %v228 = vld [vmem:[#allocation5 + $0x4e8] sm:$0xff]
    %v229 = vld [vmem:[#allocation5 + $0x4f0] sm:$0xff]
    %v230 = vld [vmem:[#allocation5 + $0x4f8] sm:$0xff]
    %v231 = vld [vmem:[#allocation5 + $0x500] sm:$0xff]
    %v232 = vld [vmem:[#allocation5 + $0x508] sm:$0xff]
    %v233 = vld [vmem:[#allocation5 + $0x510] sm:$0xff]
    %v234 = vld [vmem:[#allocation5 + $0x518] sm:$0xff]
    %v235 = vld [vmem:[#allocation5 + $0x520] sm:$0xff]
    %v236 = vld [vmem:[#allocation5 + $0x528] sm:$0xff]
    %v237 = vld [vmem:[#allocation5 + $0x530] sm:$0xff]
    %v238 = vld [vmem:[#allocation5 + $0x538] sm:$0xff]
    %v239 = vld [vmem:[#allocation5 + $0x540] sm:$0xff]
    %v240 = vld [vmem:[#allocation5 + $0x548] sm:$0xff]
    %v241 = vld [vmem:[#allocation5 + $0x550] sm:$0xff]
    %v242 = vld [vmem:[#allocation5 + $0x558] sm:$0xff]
    %v243 = vld [vmem:[#allocation5 + $0x560] sm:$0xff]
    %v244 = vld [vmem:[#allocation5 + $0x568] sm:$0xff]
    %v245 = vld [vmem:[#allocation5 + $0x570] sm:$0xff]
    %v246 = vld [vmem:[#allocation5 + $0x578] sm:$0xff]
    %v247 = vld [vmem:[#allocation5 + $0x580] sm:$0xff]
    %v248 = vld [vmem:[#allocation5 + $0x588] sm:$0xff]
    %v249 = vld [vmem:[#allocation5 + $0x590] sm:$0xff]
    %v250 = vld [vmem:[#allocation5 + $0x598] sm:$0xff]
    %v251 = vld [vmem:[#allocation5 + $0x5a0] sm:$0xff]
    %v252 = vld [vmem:[#allocation5 + $0x5a8] sm:$0xff]
    %v253 = vld [vmem:[#allocation5 + $0x5b0] sm:$0xff]
    %v254 = vld [vmem:[#allocation5 + $0x5b8] sm:$0xff]
    %v255 = vld [vmem:[#allocation5 + $0x5c0] sm:$0xff]
    %v256 = vld [vmem:[#allocation5 + $0x5c8] sm:$0xff]
    %v257 = vld [vmem:[#allocation5 + $0x5d0] sm:$0xff]
    %v258 = vld [vmem:[#allocation5 + $0x5d8] sm:$0xff]
    %v259 = vld [vmem:[#allocation5 + $0x5e0] sm:$0xff]
    %v260 = vld [vmem:[#allocation5 + $0x5e8] sm:$0xff]
    %v261 = vld [vmem:[#allocation5 + $0x5f0] sm:$0xff]
    %v262 = vld [vmem:[#allocation5 + $0x5f8] sm:$0xff]
    %v263 = vld [vmem:[#allocation5 + $0x600] sm:$0xff]
    %v264 = vld [vmem:[#allocation5 + $0x608] sm:$0xff]
    %v265 = vld [vmem:[#allocation5 + $0x610] sm:$0xff]
    %v266 = vld [vmem:[#allocation5 + $0x618] sm:$0xff]
    %v267 = vld [vmem:[%s2] sm:$0xf]
    %v269 = vlaneseq
    %v270 = vshrl.u32 %v269, 7
    %v271 = vsub.s32 0, %v270
    %v272 = vrot.slane %v267, %v271
    %v273 = vlaneseq
    %v274 = vshrl.u32 %v273, 7
    %v275 = vsub.s32 1, %v274
    %v276 = vrot.slane %v267, %v275
    %v277 = vlaneseq
    %v278 = vshrl.u32 %v277, 7
    %v279 = vsub.s32 2, %v278
    %v280 = vrot.slane %v267, %v279
    %v281 = vlaneseq
    %v282 = vshrl.u32 %v281, 7
    %v283 = vsub.s32 3, %v282
    %v284 = vrot.slane %v267, %v283
    %v297 = vunpack.c.l.b16 %v63
    %v298 = vunpack.c.h.b16 %v63
    %v299 = vunpack.c.l.b16 %v64
    %v300 = vunpack.c.h.b16 %v64
    %v301 = vunpack.c.l.b16 %v65
    %v302 = vunpack.c.h.b16 %v65
    %v303 = vunpack.c.l.b16 %v66
    %v304 = vunpack.c.l.b16 %v67
    %v305 = vunpack.c.h.b16 %v67
    %v306 = vunpack.c.l.b16 %v68
    %v307 = vunpack.c.h.b16 %v68
    %v308 = vunpack.c.l.b16 %v69
    %v309 = vunpack.c.h.b16 %v69
    %v310 = vunpack.c.l.b16 %v70
    %v311 = vpack.c.b16 %v304, %v297
    %v312 = vpack.c.b16 %v305, %v298
    %v313 = vpack.c.b16 %v306, %v299
    %v314 = vpack.c.b16 %v307, %v300
    %v315 = vpack.c.b16 %v308, %v301
    %v316 = vpack.c.b16 %v309, %v302
    %v317 = vpack.c.b16 %v310, %v303
    %v520 = vunpack.c.l.b16 %v71
    %v521 = vunpack.c.h.b16 %v71
    %v522 = vunpack.c.l.b16 %v72
    %v523 = vunpack.c.h.b16 %v72
    %v524 = vunpack.c.l.b16 %v73
    %v525 = vunpack.c.h.b16 %v73
    %v526 = vunpack.c.l.b16 %v74
    %v527 = vunpack.c.h.b16 %v74
    %v528 = vunpack.c.l.b16 %v75
    %v529 = vunpack.c.h.b16 %v75
    %v530 = vunpack.c.l.b16 %v76
    %v531 = vunpack.c.h.b16 %v76
    %v532 = vunpack.c.l.b16 %v77
    %v533 = vunpack.c.h.b16 %v77
    %v534 = vunpack.c.l.b16 %v78
    %v535 = vunpack.c.h.b16 %v78
    %v536 = vunpack.c.l.b16 %v79
    %v537 = vunpack.c.h.b16 %v79
    %v538 = vunpack.c.l.b16 %v80
    %v539 = vunpack.c.h.b16 %v80
    %v540 = vunpack.c.l.b16 %v81
    %v541 = vunpack.c.h.b16 %v81
    %v542 = vunpack.c.l.b16 %v82
    %v543 = vunpack.c.h.b16 %v82
    %v544 = vunpack.c.l.b16 %v83
    %v545 = vunpack.c.h.b16 %v83
    %v546 = vunpack.c.l.b16 %v84
    %v547 = vunpack.c.h.b16 %v84
    %v548 = vunpack.c.l.b16 %v85
    %v549 = vunpack.c.h.b16 %v85
    %v550 = vunpack.c.l.b16 %v86
    %v551 = vunpack.c.h.b16 %v86
    %v552 = vunpack.c.l.b16 %v87
    %v553 = vunpack.c.h.b16 %v87
    %v554 = vunpack.c.l.b16 %v88
    %v555 = vunpack.c.h.b16 %v88
    %v556 = vunpack.c.l.b16 %v89
    %v557 = vunpack.c.h.b16 %v89
    %v558 = vunpack.c.l.b16 %v90
    %v559 = vunpack.c.h.b16 %v90
    %v560 = vunpack.c.l.b16 %v91
    %v561 = vunpack.c.h.b16 %v91
    %v562 = vunpack.c.l.b16 %v92
    %v563 = vunpack.c.h.b16 %v92
    %v564 = vunpack.c.l.b16 %v93
    %v565 = vunpack.c.h.b16 %v93
    %v566 = vunpack.c.l.b16 %v94
    %v567 = vunpack.c.h.b16 %v94
    %v568 = vunpack.c.l.b16 %v95
    %v569 = vunpack.c.h.b16 %v95
    %v570 = vunpack.c.l.b16 %v96
    %v571 = vunpack.c.h.b16 %v96
    %v572 = vunpack.c.l.b16 %v97
    %v573 = vunpack.c.h.b16 %v97
    %v574 = vunpack.c.l.b16 %v98
    %v575 = vunpack.c.h.b16 %v98
    %v576 = vunpack.c.l.b16 %v99
    %v577 = vunpack.c.h.b16 %v99
    %v578 = vunpack.c.l.b16 %v100
    %v579 = vunpack.c.h.b16 %v100
    %v580 = vunpack.c.l.b16 %v101
    %v581 = vunpack.c.h.b16 %v101
    %v582 = vunpack.c.l.b16 %v102
    %v583 = vunpack.c.h.b16 %v102
    %v584 = vunpack.c.l.b16 %v103
    %v585 = vunpack.c.h.b16 %v103
    %v586 = vunpack.c.l.b16 %v104
    %v587 = vunpack.c.h.b16 %v104
    %v588 = vunpack.c.l.b16 %v105
    %v589 = vunpack.c.h.b16 %v105
    %v590 = vunpack.c.l.b16 %v106
    %v591 = vunpack.c.h.b16 %v106
    %v592 = vunpack.c.l.b16 %v107
    %v593 = vunpack.c.h.b16 %v107
    %v594 = vunpack.c.l.b16 %v108
    %v595 = vunpack.c.h.b16 %v108
    %v596 = vunpack.c.l.b16 %v109
    %v597 = vunpack.c.h.b16 %v109
    %v598 = vunpack.c.l.b16 %v110
    %v599 = vunpack.c.h.b16 %v110
    %v600 = vunpack.c.l.b16 %v111
    %v601 = vunpack.c.h.b16 %v111
    %v602 = vunpack.c.l.b16 %v112
    %v603 = vunpack.c.h.b16 %v112
    %v604 = vunpack.c.l.b16 %v113
    %v605 = vunpack.c.h.b16 %v113
    %v606 = vunpack.c.l.b16 %v114
    %v607 = vunpack.c.h.b16 %v114
    %v608 = vunpack.c.l.b16 %v115
    %v609 = vunpack.c.h.b16 %v115
    %v610 = vunpack.c.l.b16 %v116
    %v611 = vunpack.c.h.b16 %v116
    %v612 = vunpack.c.l.b16 %v117
    %v613 = vunpack.c.h.b16 %v117
    %v614 = vunpack.c.l.b16 %v118
    %v615 = vunpack.c.h.b16 %v118
    %v616 = vunpack.c.l.b16 %v119
    %v617 = vunpack.c.h.b16 %v119
    %v618 = vunpack.c.l.b16 %v120
    %v619 = vunpack.c.h.b16 %v120
    %v620 = vunpack.c.l.b16 %v121
    %v621 = vunpack.c.h.b16 %v121
    %v622 = vunpack.c.l.b16 %v122
    %v623 = vunpack.c.h.b16 %v122
    %v624 = vunpack.c.l.b16 %v123
    %v625 = vunpack.c.h.b16 %v123
    %v626 = vunpack.c.l.b16 %v124
    %v627 = vunpack.c.h.b16 %v124
    %v628 = vunpack.c.l.b16 %v125
    %v629 = vunpack.c.h.b16 %v125
    %v630 = vunpack.c.l.b16 %v126
    %v631 = vunpack.c.h.b16 %v126
    %v632 = vunpack.c.l.b16 %v127
    %v633 = vunpack.c.h.b16 %v127
    %v634 = vunpack.c.l.b16 %v128
    %v635 = vunpack.c.h.b16 %v128
    %v636 = vunpack.c.l.b16 %v129
    %v637 = vunpack.c.h.b16 %v129
    %v638 = vunpack.c.l.b16 %v130
    %v639 = vunpack.c.h.b16 %v130
    %v640 = vunpack.c.l.b16 %v131
    %v641 = vunpack.c.h.b16 %v131
    %v642 = vunpack.c.l.b16 %v132
    %v643 = vunpack.c.h.b16 %v132
    %v644 = vunpack.c.l.b16 %v133
    %v645 = vunpack.c.h.b16 %v133
    %v646 = vunpack.c.l.b16 %v134
    %v647 = vunpack.c.h.b16 %v134
    %v648 = vunpack.c.l.b16 %v135
    %v649 = vunpack.c.h.b16 %v135
    %v650 = vunpack.c.l.b16 %v136
    %v651 = vunpack.c.h.b16 %v136
    %v652 = vunpack.c.l.b16 %v137
    %v653 = vunpack.c.h.b16 %v137
    %v654 = vunpack.c.l.b16 %v138
    %v655 = vunpack.c.h.b16 %v138
    %v656 = vunpack.c.l.b16 %v139
    %v657 = vunpack.c.h.b16 %v139
    %v658 = vunpack.c.l.b16 %v140
    %v659 = vunpack.c.h.b16 %v140
    %v660 = vunpack.c.l.b16 %v141
    %v661 = vunpack.c.h.b16 %v141
    %v662 = vunpack.c.l.b16 %v142
    %v663 = vunpack.c.h.b16 %v142
    %v664 = vunpack.c.l.b16 %v143
    %v665 = vunpack.c.h.b16 %v143
    %v666 = vunpack.c.l.b16 %v144
    %v667 = vunpack.c.h.b16 %v144
    %v668 = vunpack.c.l.b16 %v145
    %v669 = vunpack.c.h.b16 %v145
    %v670 = vunpack.c.l.b16 %v146
    %v671 = vunpack.c.h.b16 %v146
    %v672 = vunpack.c.l.b16 %v147
    %v673 = vunpack.c.h.b16 %v147
    %v674 = vunpack.c.l.b16 %v148
    %v675 = vunpack.c.h.b16 %v148
    %v676 = vunpack.c.l.b16 %v149
    %v677 = vunpack.c.h.b16 %v149
    %v678 = vunpack.c.l.b16 %v150
    %v679 = vunpack.c.h.b16 %v150
    %v680 = vunpack.c.l.b16 %v151
    %v681 = vunpack.c.h.b16 %v151
    %v682 = vunpack.c.l.b16 %v152
    %v683 = vunpack.c.h.b16 %v152
    %v684 = vunpack.c.l.b16 %v153
    %v685 = vunpack.c.h.b16 %v153
    %v686 = vunpack.c.l.b16 %v154
    %v687 = vunpack.c.h.b16 %v154
    %v688 = vunpack.c.l.b16 %v155
    %v689 = vunpack.c.h.b16 %v155
    %v690 = vunpack.c.l.b16 %v156
    %v691 = vunpack.c.h.b16 %v156
    %v692 = vunpack.c.l.b16 %v157
    %v693 = vunpack.c.h.b16 %v157
    %v694 = vunpack.c.l.b16 %v158
    %v695 = vunpack.c.h.b16 %v158
    %v696 = vunpack.c.l.b16 %v159
    %v697 = vunpack.c.h.b16 %v159
    %v698 = vunpack.c.l.b16 %v160
    %v699 = vunpack.c.h.b16 %v160
    %v700 = vunpack.c.l.b16 %v161
    %v701 = vunpack.c.h.b16 %v161
    %v702 = vunpack.c.l.b16 %v162
    %v703 = vunpack.c.h.b16 %v162
    %v704 = vunpack.c.l.b16 %v163
    %v705 = vunpack.c.h.b16 %v163
    %v706 = vunpack.c.l.b16 %v164
    %v707 = vunpack.c.h.b16 %v164
    %v708 = vunpack.c.l.b16 %v165
    %v709 = vunpack.c.h.b16 %v165
    %v710 = vunpack.c.l.b16 %v166
    %v711 = vunpack.c.h.b16 %v166
    %v712 = vunpack.c.l.b16 %v167
    %v713 = vunpack.c.h.b16 %v167
    %v714 = vunpack.c.l.b16 %v168
    %v715 = vunpack.c.h.b16 %v168
    %v716 = vunpack.c.l.b16 %v169
    %v717 = vunpack.c.h.b16 %v169
    %v718 = vunpack.c.l.b16 %v170
    %v719 = vunpack.c.h.b16 %v170
    %v720 = vunpack.c.l.b16 %v171
    %v721 = vunpack.c.h.b16 %v171
    %v722 = vunpack.c.l.b16 %v172
    %v723 = vunpack.c.h.b16 %v172
    %v724 = vunpack.c.l.b16 %v173
    %v725 = vunpack.c.h.b16 %v173
    %v726 = vunpack.c.l.b16 %v174
    %v727 = vunpack.c.h.b16 %v174
    %v728 = vunpack.c.l.b16 %v175
    %v729 = vunpack.c.h.b16 %v175
    %v730 = vunpack.c.l.b16 %v176
    %v731 = vunpack.c.h.b16 %v176
    %v732 = vunpack.c.l.b16 %v177
    %v733 = vunpack.c.h.b16 %v177
    %v734 = vunpack.c.l.b16 %v178
    %v735 = vunpack.c.h.b16 %v178
    %v736 = vunpack.c.l.b16 %v179
    %v737 = vunpack.c.h.b16 %v179
    %v738 = vunpack.c.l.b16 %v180
    %v739 = vunpack.c.h.b16 %v180
    %v740 = vunpack.c.l.b16 %v181
    %v741 = vunpack.c.h.b16 %v181
    %v742 = vunpack.c.l.b16 %v182
    %v743 = vunpack.c.h.b16 %v182
    %v744 = vunpack.c.l.b16 %v183
    %v745 = vunpack.c.h.b16 %v183
    %v746 = vunpack.c.l.b16 %v184
    %v747 = vunpack.c.h.b16 %v184
    %v748 = vunpack.c.l.b16 %v185
    %v749 = vunpack.c.h.b16 %v185
    %v750 = vunpack.c.l.b16 %v186
    %v751 = vunpack.c.h.b16 %v186
    %v752 = vunpack.c.l.b16 %v187
    %v753 = vunpack.c.h.b16 %v187
    %v754 = vunpack.c.l.b16 %v188
    %v755 = vunpack.c.h.b16 %v188
    %v756 = vunpack.c.l.b16 %v189
    %v757 = vunpack.c.h.b16 %v189
    %v758 = vunpack.c.l.b16 %v190
    %v759 = vunpack.c.h.b16 %v190
    %v760 = vunpack.c.l.b16 %v191
    %v761 = vunpack.c.h.b16 %v191
    %v762 = vunpack.c.l.b16 %v192
    %v763 = vunpack.c.h.b16 %v192
    %v764 = vunpack.c.l.b16 %v193
    %v765 = vunpack.c.h.b16 %v193
    %v766 = vunpack.c.l.b16 %v194
    %v767 = vunpack.c.h.b16 %v194
    %v768 = vunpack.c.l.b16 %v195
    %v769 = vunpack.c.h.b16 %v195
    %v770 = vunpack.c.l.b16 %v196
    %v771 = vunpack.c.h.b16 %v196
    %v772 = vunpack.c.l.b16 %v197
    %v773 = vunpack.c.h.b16 %v197
    %v774 = vunpack.c.l.b16 %v198
    %v775 = vunpack.c.h.b16 %v198
    %v776 = vunpack.c.l.b16 %v199
    %v777 = vunpack.c.h.b16 %v199
    %v778 = vunpack.c.l.b16 %v200
    %v779 = vunpack.c.h.b16 %v200
    %v780 = vunpack.c.l.b16 %v201
    %v781 = vunpack.c.h.b16 %v201
    %v782 = vunpack.c.l.b16 %v202
    %v783 = vunpack.c.h.b16 %v202
    %v784 = vunpack.c.l.b16 %v203
    %v785 = vunpack.c.h.b16 %v203
    %v786 = vunpack.c.l.b16 %v204
    %v787 = vunpack.c.h.b16 %v204
    %v788 = vunpack.c.l.b16 %v205
    %v789 = vunpack.c.h.b16 %v205
    %v790 = vunpack.c.l.b16 %v206
    %v791 = vunpack.c.h.b16 %v206
    %v792 = vunpack.c.l.b16 %v207
    %v793 = vunpack.c.h.b16 %v207
    %v794 = vunpack.c.l.b16 %v208
    %v795 = vunpack.c.h.b16 %v208
    %v796 = vunpack.c.l.b16 %v209
    %v797 = vunpack.c.h.b16 %v209
    %v798 = vunpack.c.l.b16 %v210
    %v799 = vunpack.c.h.b16 %v210
    %v800 = vunpack.c.l.b16 %v211
    %v801 = vunpack.c.h.b16 %v211
    %v802 = vunpack.c.l.b16 %v212
    %v803 = vunpack.c.h.b16 %v212
    %v804 = vunpack.c.l.b16 %v213
    %v805 = vunpack.c.h.b16 %v213
    %v806 = vunpack.c.l.b16 %v214
    %v807 = vunpack.c.h.b16 %v214
    %v808 = vunpack.c.l.b16 %v215
    %v809 = vunpack.c.h.b16 %v215
    %v810 = vunpack.c.l.b16 %v216
    %v811 = vunpack.c.h.b16 %v216
    %v812 = vunpack.c.l.b16 %v217
    %v813 = vunpack.c.h.b16 %v217
    %v814 = vunpack.c.l.b16 %v218
    %v815 = vunpack.c.h.b16 %v218
    %v816 = vunpack.c.l.b16 %v219
    %v817 = vunpack.c.h.b16 %v219
    %v818 = vunpack.c.l.b16 %v220
    %v819 = vunpack.c.h.b16 %v220
    %v820 = vunpack.c.l.b16 %v221
    %v821 = vunpack.c.h.b16 %v221
    %v822 = vunpack.c.l.b16 %v222
    %v823 = vunpack.c.h.b16 %v222
    %v824 = vunpack.c.l.b16 %v223
    %v825 = vunpack.c.h.b16 %v223
    %v826 = vunpack.c.l.b16 %v224
    %v827 = vunpack.c.h.b16 %v224
    %v828 = vunpack.c.l.b16 %v225
    %v829 = vunpack.c.h.b16 %v225
    %v830 = vunpack.c.l.b16 %v226
    %v831 = vunpack.c.h.b16 %v226
    %v832 = vunpack.c.l.b16 %v227
    %v833 = vunpack.c.h.b16 %v227
    %v834 = vunpack.c.l.b16 %v228
    %v835 = vunpack.c.h.b16 %v228
    %v836 = vunpack.c.l.b16 %v229
    %v837 = vunpack.c.h.b16 %v229
    %v838 = vunpack.c.l.b16 %v230
    %v839 = vunpack.c.h.b16 %v230
    %v840 = vunpack.c.l.b16 %v231
    %v841 = vunpack.c.h.b16 %v231
    %v842 = vunpack.c.l.b16 %v232
    %v843 = vunpack.c.h.b16 %v232
    %v844 = vunpack.c.l.b16 %v233
    %v845 = vunpack.c.h.b16 %v233
    %v846 = vunpack.c.l.b16 %v234
    %v847 = vunpack.c.h.b16 %v234
    %v848 = vunpack.c.l.b16 %v235
    %v849 = vunpack.c.h.b16 %v235
    %v850 = vunpack.c.l.b16 %v236
    %v851 = vunpack.c.h.b16 %v236
    %v852 = vunpack.c.l.b16 %v237
    %v853 = vunpack.c.h.b16 %v237
    %v854 = vunpack.c.l.b16 %v238
    %v855 = vunpack.c.h.b16 %v238
    %v856 = vunpack.c.l.b16 %v239
    %v857 = vunpack.c.h.b16 %v239
    %v858 = vunpack.c.l.b16 %v240
    %v859 = vunpack.c.h.b16 %v240
    %v860 = vunpack.c.l.b16 %v241
    %v861 = vunpack.c.h.b16 %v241
    %v862 = vunpack.c.l.b16 %v242
    %v863 = vunpack.c.h.b16 %v242
    %v864 = vunpack.c.l.b16 %v243
    %v865 = vunpack.c.h.b16 %v243
    %v866 = vunpack.c.l.b16 %v244
    %v867 = vunpack.c.h.b16 %v244
    %v868 = vunpack.c.l.b16 %v245
    %v869 = vunpack.c.h.b16 %v245
    %v870 = vunpack.c.l.b16 %v246
    %v871 = vunpack.c.h.b16 %v246
    %v872 = vunpack.c.l.b16 %v247
    %v873 = vunpack.c.h.b16 %v247
    %v874 = vunpack.c.l.b16 %v248
    %v875 = vunpack.c.h.b16 %v248
    %v876 = vunpack.c.l.b16 %v249
    %v877 = vunpack.c.h.b16 %v249
    %v878 = vunpack.c.l.b16 %v250
    %v879 = vunpack.c.h.b16 %v250
    %v880 = vunpack.c.l.b16 %v251
    %v881 = vunpack.c.h.b16 %v251
    %v882 = vunpack.c.l.b16 %v252
    %v883 = vunpack.c.h.b16 %v252
    %v884 = vunpack.c.l.b16 %v253
    %v885 = vunpack.c.h.b16 %v253
    %v886 = vunpack.c.l.b16 %v254
    %v887 = vunpack.c.h.b16 %v254
    %v888 = vunpack.c.l.b16 %v255
    %v889 = vunpack.c.h.b16 %v255
    %v890 = vunpack.c.l.b16 %v256
    %v891 = vunpack.c.h.b16 %v256
    %v892 = vunpack.c.l.b16 %v257
    %v893 = vunpack.c.h.b16 %v257
    %v894 = vunpack.c.l.b16 %v258
    %v895 = vunpack.c.h.b16 %v258
    %v896 = vunpack.c.l.b16 %v259
    %v897 = vunpack.c.h.b16 %v259
    %v898 = vunpack.c.l.b16 %v260
    %v899 = vunpack.c.h.b16 %v260
    %v900 = vunpack.c.l.b16 %v261
    %v901 = vunpack.c.h.b16 %v261
    %v902 = vunpack.c.l.b16 %v262
    %v903 = vunpack.c.h.b16 %v262
    %v904 = vunpack.c.l.b16 %v263
    %v905 = vunpack.c.h.b16 %v263
    %v906 = vunpack.c.l.b16 %v264
    %v907 = vunpack.c.h.b16 %v264
    %v908 = vunpack.c.l.b16 %v265
    %v909 = vunpack.c.h.b16 %v265
    %v910 = vunpack.c.l.b16 %v266
    %v911 = vunpack.c.h.b16 %v266
    %v912 = vpack.c.b16 %v524, %v520
    %v913 = vpack.c.b16 %v525, %v521
    %v914 = vpack.c.b16 %v526, %v522
    %v915 = vpack.c.b16 %v527, %v523
    %v916 = vpack.c.b16 %v532, %v528
    %v917 = vpack.c.b16 %v533, %v529
    %v918 = vpack.c.b16 %v534, %v530
    %v919 = vpack.c.b16 %v535, %v531
    %v920 = vpack.c.b16 %v540, %v536
    %v921 = vpack.c.b16 %v541, %v537
    %v922 = vpack.c.b16 %v542, %v538
    %v923 = vpack.c.b16 %v543, %v539
    %v924 = vpack.c.b16 %v548, %v544
    %v925 = vpack.c.b16 %v549, %v545
    %v926 = vpack.c.b16 %v550, %v546
    %v927 = vpack.c.b16 %v551, %v547
    %v928 = vpack.c.b16 %v556, %v552
    %v929 = vpack.c.b16 %v557, %v553
    %v930 = vpack.c.b16 %v558, %v554
    %v931 = vpack.c.b16 %v559, %v555
    %v932 = vpack.c.b16 %v564, %v560
    %v933 = vpack.c.b16 %v565, %v561
    %v934 = vpack.c.b16 %v566, %v562
    %v935 = vpack.c.b16 %v567, %v563
    %v936 = vpack.c.b16 %v572, %v568
    %v937 = vpack.c.b16 %v573, %v569
    %v938 = vpack.c.b16 %v574, %v570
    %v939 = vpack.c.b16 %v575, %v571
    %v940 = vpack.c.b16 %v580, %v576
    %v941 = vpack.c.b16 %v581, %v577
    %v942 = vpack.c.b16 %v582, %v578
    %v943 = vpack.c.b16 %v583, %v579
    %v944 = vpack.c.b16 %v588, %v584
    %v945 = vpack.c.b16 %v589, %v585
    %v946 = vpack.c.b16 %v590, %v586
    %v947 = vpack.c.b16 %v591, %v587
    %v948 = vpack.c.b16 %v596, %v592
    %v949 = vpack.c.b16 %v597, %v593
    %v950 = vpack.c.b16 %v598, %v594
    %v951 = vpack.c.b16 %v599, %v595
    %v952 = vpack.c.b16 %v604, %v600
    %v953 = vpack.c.b16 %v605, %v601
    %v954 = vpack.c.b16 %v606, %v602
    %v955 = vpack.c.b16 %v607, %v603
    %v956 = vpack.c.b16 %v612, %v608
    %v957 = vpack.c.b16 %v613, %v609
    %v958 = vpack.c.b16 %v614, %v610
    %v959 = vpack.c.b16 %v615, %v611
    %v960 = vpack.c.b16 %v620, %v616
    %v961 = vpack.c.b16 %v621, %v617
    %v962 = vpack.c.b16 %v622, %v618
    %v963 = vpack.c.b16 %v623, %v619
    %v964 = vpack.c.b16 %v628, %v624
    %v965 = vpack.c.b16 %v629, %v625
    %v966 = vpack.c.b16 %v630, %v626
    %v967 = vpack.c.b16 %v631, %v627
    %v968 = vpack.c.b16 %v636, %v632
    %v969 = vpack.c.b16 %v637, %v633
    %v970 = vpack.c.b16 %v638, %v634
    %v971 = vpack.c.b16 %v639, %v635
    %v972 = vpack.c.b16 %v644, %v640
    %v973 = vpack.c.b16 %v645, %v641
    %v974 = vpack.c.b16 %v646, %v642
    %v975 = vpack.c.b16 %v647, %v643
    %v976 = vpack.c.b16 %v652, %v648
    %v977 = vpack.c.b16 %v653, %v649
    %v978 = vpack.c.b16 %v654, %v650
    %v979 = vpack.c.b16 %v655, %v651
    %v980 = vpack.c.b16 %v660, %v656
    %v981 = vpack.c.b16 %v661, %v657
    %v982 = vpack.c.b16 %v662, %v658
    %v983 = vpack.c.b16 %v663, %v659
    %v984 = vpack.c.b16 %v668, %v664
    %v985 = vpack.c.b16 %v669, %v665
    %v986 = vpack.c.b16 %v670, %v666
    %v987 = vpack.c.b16 %v671, %v667
    %v988 = vpack.c.b16 %v676, %v672
    %v989 = vpack.c.b16 %v677, %v673
    %v990 = vpack.c.b16 %v678, %v674
    %v991 = vpack.c.b16 %v679, %v675
    %v992 = vpack.c.b16 %v684, %v680
    %v993 = vpack.c.b16 %v685, %v681
    %v994 = vpack.c.b16 %v686, %v682
    %v995 = vpack.c.b16 %v687, %v683
    %v996 = vpack.c.b16 %v692, %v688
    %v997 = vpack.c.b16 %v693, %v689
    %v998 = vpack.c.b16 %v694, %v690
    %v999 = vpack.c.b16 %v695, %v691
    %v1000 = vpack.c.b16 %v700, %v696
    %v1001 = vpack.c.b16 %v701, %v697
    %v1002 = vpack.c.b16 %v702, %v698
    %v1003 = vpack.c.b16 %v703, %v699
    %v1004 = vpack.c.b16 %v708, %v704
    %v1005 = vpack.c.b16 %v709, %v705
    %v1006 = vpack.c.b16 %v710, %v706
    %v1007 = vpack.c.b16 %v711, %v707
    %v1008 = vpack.c.b16 %v716, %v712
    %v1009 = vpack.c.b16 %v717, %v713
    %v1010 = vpack.c.b16 %v718, %v714
    %v1011 = vpack.c.b16 %v719, %v715
    %v1012 = vpack.c.b16 %v724, %v720
    %v1013 = vpack.c.b16 %v725, %v721
    %v1014 = vpack.c.b16 %v726, %v722
    %v1015 = vpack.c.b16 %v727, %v723
    %v1016 = vpack.c.b16 %v732, %v728
    %v1017 = vpack.c.b16 %v733, %v729
    %v1018 = vpack.c.b16 %v734, %v730
    %v1019 = vpack.c.b16 %v735, %v731
    %v1020 = vpack.c.b16 %v740, %v736
    %v1021 = vpack.c.b16 %v741, %v737
    %v1022 = vpack.c.b16 %v742, %v738
    %v1023 = vpack.c.b16 %v743, %v739
    %v1024 = vpack.c.b16 %v748, %v744
    %v1025 = vpack.c.b16 %v749, %v745
    %v1026 = vpack.c.b16 %v750, %v746
    %v1027 = vpack.c.b16 %v751, %v747
    %v1028 = vpack.c.b16 %v756, %v752
    %v1029 = vpack.c.b16 %v757, %v753
    %v1030 = vpack.c.b16 %v758, %v754
    %v1031 = vpack.c.b16 %v759, %v755
    %v1032 = vpack.c.b16 %v764, %v760
    %v1033 = vpack.c.b16 %v765, %v761
    %v1034 = vpack.c.b16 %v766, %v762
    %v1035 = vpack.c.b16 %v767, %v763
    %v1036 = vpack.c.b16 %v772, %v768
    %v1037 = vpack.c.b16 %v773, %v769
    %v1038 = vpack.c.b16 %v774, %v770
    %v1039 = vpack.c.b16 %v775, %v771
    %v1040 = vpack.c.b16 %v780, %v776
    %v1041 = vpack.c.b16 %v781, %v777
    %v1042 = vpack.c.b16 %v782, %v778
    %v1043 = vpack.c.b16 %v783, %v779
    %v1044 = vpack.c.b16 %v788, %v784
    %v1045 = vpack.c.b16 %v789, %v785
    %v1046 = vpack.c.b16 %v790, %v786
    %v1047 = vpack.c.b16 %v791, %v787
    %v1048 = vpack.c.b16 %v796, %v792
    %v1049 = vpack.c.b16 %v797, %v793
    %v1050 = vpack.c.b16 %v798, %v794
    %v1051 = vpack.c.b16 %v799, %v795
    %v1052 = vpack.c.b16 %v804, %v800
    %v1053 = vpack.c.b16 %v805, %v801
    %v1054 = vpack.c.b16 %v806, %v802
    %v1055 = vpack.c.b16 %v807, %v803
    %v1056 = vpack.c.b16 %v812, %v808
    %v1057 = vpack.c.b16 %v813, %v809
    %v1058 = vpack.c.b16 %v814, %v810
    %v1059 = vpack.c.b16 %v815, %v811
    %v1060 = vpack.c.b16 %v820, %v816
    %v1061 = vpack.c.b16 %v821, %v817
    %v1062 = vpack.c.b16 %v822, %v818
    %v1063 = vpack.c.b16 %v823, %v819
    %v1064 = vpack.c.b16 %v828, %v824
    %v1065 = vpack.c.b16 %v829, %v825
    %v1066 = vpack.c.b16 %v830, %v826
    %v1067 = vpack.c.b16 %v831, %v827
    %v1068 = vpack.c.b16 %v836, %v832
    %v1069 = vpack.c.b16 %v837, %v833
    %v1070 = vpack.c.b16 %v838, %v834
    %v1071 = vpack.c.b16 %v839, %v835
    %v1072 = vpack.c.b16 %v844, %v840
    %v1073 = vpack.c.b16 %v845, %v841
    %v1074 = vpack.c.b16 %v846, %v842
    %v1075 = vpack.c.b16 %v847, %v843
    %v1076 = vpack.c.b16 %v852, %v848
    %v1077 = vpack.c.b16 %v853, %v849
    %v1078 = vpack.c.b16 %v854, %v850
    %v1079 = vpack.c.b16 %v855, %v851
    %v1080 = vpack.c.b16 %v860, %v856
    %v1081 = vpack.c.b16 %v861, %v857
    %v1082 = vpack.c.b16 %v862, %v858
    %v1083 = vpack.c.b16 %v863, %v859
    %v1084 = vpack.c.b16 %v868, %v864
    %v1085 = vpack.c.b16 %v869, %v865
    %v1086 = vpack.c.b16 %v870, %v866
    %v1087 = vpack.c.b16 %v871, %v867
    %v1088 = vpack.c.b16 %v876, %v872
    %v1089 = vpack.c.b16 %v877, %v873
    %v1090 = vpack.c.b16 %v878, %v874
    %v1091 = vpack.c.b16 %v879, %v875
    %v1092 = vpack.c.b16 %v884, %v880
    %v1093 = vpack.c.b16 %v885, %v881
    %v1094 = vpack.c.b16 %v886, %v882
    %v1095 = vpack.c.b16 %v887, %v883
    %v1096 = vpack.c.b16 %v892, %v888
    %v1097 = vpack.c.b16 %v893, %v889
    %v1098 = vpack.c.b16 %v894, %v890
    %v1099 = vpack.c.b16 %v895, %v891
    %v1100 = vpack.c.b16 %v900, %v896
    %v1101 = vpack.c.b16 %v901, %v897
    %v1102 = vpack.c.b16 %v902, %v898
    %v1103 = vpack.c.b16 %v903, %v899
    %v1104 = vpack.c.b16 %v908, %v904
    %v1105 = vpack.c.b16 %v909, %v905
    %v1106 = vpack.c.b16 %v910, %v906
    %v1107 = vpack.c.b16 %v911, %v907
    %vm1304 = vcmask 130048
    %v1306 = vsel %vm1304, %v317, 0
    %1308 = vmatprep.subr.bf16.mxu0 %v913
    %1309 = vmatpush1.bf16.msra.mxu0 %v912
    %1310 = vmatprep.subr.bf16.mxu0 %v917
    %1311 = vmatpush1.bf16.msra.mxu0 %v916
    %1312 = vmatprep.subr.bf16.mxu0 %v921
    %1313 = vmatpush1.bf16.msra.mxu0 %v920
    %1314 = vmatprep.subr.bf16.mxu0 %v925
    %1315 = vmatpush1.bf16.msra.mxu0 %v924
    %1316 = vmatprep.subr.bf16.mxu0 %v929
    %1317 = vmatpush1.bf16.msra.mxu0 %v928
    %1318 = vmatprep.subr.bf16.mxu0 %v933
    %1319 = vmatpush1.bf16.msra.mxu0 %v932
    %1320 = vmatprep.subr.bf16.mxu0 %v937
    %1321 = vmatpush1.bf16.msra.mxu0 %v936
    %1322 = vmatprep.subr.bf16.mxu0 %v941
    %1323 = vmatpush1.bf16.msra.mxu0 %v940
    %1324 = vmatprep.subr.bf16.mxu0 %v945
    %1325 = vmatpush1.bf16.msra.mxu0 %v944
    %1326 = vmatprep.subr.bf16.mxu0 %v949
    %1327 = vmatpush1.bf16.msra.mxu0 %v948
    %1328 = vmatprep.subr.bf16.mxu0 %v953
    %1329 = vmatpush1.bf16.msra.mxu0 %v952
    %1330 = vmatprep.subr.bf16.mxu0 %v957
    %1331 = vmatpush1.bf16.msra.mxu0 %v956
    %1332 = vmatprep.subr.bf16.mxu0 %v961
    %1333 = vmatpush1.bf16.msra.mxu0 %v960
    %1334 = vmatprep.subr.bf16.mxu0 %v965
    %1335 = vmatpush1.bf16.msra.mxu0 %v964
    %1336 = vmatprep.subr.bf16.mxu0 %v969
    %1337 = vmatpush1.bf16.msra.mxu0 %v968
    %1338 = vmatprep.subr.bf16.mxu0 %v973
    %1339 = vmatpush1.bf16.msra.mxu0 %v972
    %1340 = vmatprep.mubr.bf16.mxu0 %v312
    %1341 = vmatmul.mubr.bf16.gmra.mrb[0].mxu0 %v311
    %v1342 = vpop.f32.mrb[0].mxu0
    %v1343 = vadd.f32 %v272, %v1342
    %v1344 = vpop.f32.mrb[0].mxu0
    %v1345 = vadd.f32 %v276, %v1344
    %v1346 = vpop.f32.mrb[0].mxu0
    %v1347 = vadd.f32 %v272, %v1346
    %v1348 = vpop.f32.mrb[0].mxu0
    %v1349 = vadd.f32 %v276, %v1348
    %1350 = vdwg.mxu0
    %1351 = vmatprep.subr.bf16.mxu0 %v977
    %1352 = vmatpush1.bf16.msra.mxu0 %v976
    %1353 = vmatprep.subr.bf16.mxu0 %v981
    %1354 = vmatpush1.bf16.msra.mxu0 %v980
    %1355 = vmatprep.subr.bf16.mxu0 %v985
    %1356 = vmatpush1.bf16.msra.mxu0 %v984
    %1357 = vmatprep.subr.bf16.mxu0 %v989
    %1358 = vmatpush1.bf16.msra.mxu0 %v988
    %1359 = vmatprep.subr.bf16.mxu0 %v993
    %1360 = vmatpush1.bf16.msra.mxu0 %v992
    %1361 = vmatprep.subr.bf16.mxu0 %v997
    %1362 = vmatpush1.bf16.msra.mxu0 %v996
    %1363 = vmatprep.subr.bf16.mxu0 %v1001
    %1364 = vmatpush1.bf16.msra.mxu0 %v1000
    %1365 = vmatprep.subr.bf16.mxu0 %v1005
    %1366 = vmatpush1.bf16.msra.mxu0 %v1004
    %1367 = vmatprep.subr.bf16.mxu0 %v1009
    %1368 = vmatpush1.bf16.msra.mxu0 %v1008
    %1369 = vmatprep.subr.bf16.mxu0 %v1013
    %1370 = vmatpush1.bf16.msra.mxu0 %v1012
    %1371 = vmatprep.subr.bf16.mxu0 %v1017
    %1372 = vmatpush1.bf16.msra.mxu0 %v1016
    %1373 = vmatprep.subr.bf16.mxu0 %v1021
    %1374 = vmatpush1.bf16.msra.mxu0 %v1020
    %1375 = vmatprep.subr.bf16.mxu0 %v1025
    %1376 = vmatpush1.bf16.msra.mxu0 %v1024
    %1377 = vmatprep.subr.bf16.mxu0 %v1029
    %1378 = vmatpush1.bf16.msra.mxu0 %v1028
    %1379 = vmatprep.subr.bf16.mxu0 %v1033
    %1380 = vmatpush1.bf16.msra.mxu0 %v1032
    %1381 = vmatprep.subr.bf16.mxu0 %v1037
    %1382 = vmatpush1.bf16.msra.mxu0 %v1036
    %1383 = vmatprep.mubr.bf16.mxu0 %v314
    %1384 = vmatmul.mubr.bf16.gmra.mrb[0].mxu0 %v313
    %v1385 = vpop.f32.mrb[0].mxu0
    %v1386 = vadd.f32 %v1343, %v1385
    %v1387 = vpop.f32.mrb[0].mxu0
    %v1388 = vadd.f32 %v1345, %v1387
    %v1389 = vpop.f32.mrb[0].mxu0
    %v1390 = vadd.f32 %v1347, %v1389
    %v1391 = vpop.f32.mrb[0].mxu0
    %v1392 = vadd.f32 %v1349, %v1391
    %1393 = vdwg.mxu0
    %1394 = vmatprep.subr.bf16.mxu0 %v1041
    %1395 = vmatpush1.bf16.msra.mxu0 %v1040
    %1396 = vmatprep.subr.bf16.mxu0 %v1045
    %1397 = vmatpush1.bf16.msra.mxu0 %v1044
    %1398 = vmatprep.subr.bf16.mxu0 %v1049
    %1399 = vmatpush1.bf16.msra.mxu0 %v1048
    %1400 = vmatprep.subr.bf16.mxu0 %v1053
    %1401 = vmatpush1.bf16.msra.mxu0 %v1052
    %1402 = vmatprep.subr.bf16.mxu0 %v1057
    %1403 = vmatpush1.bf16.msra.mxu0 %v1056
    %1404 = vmatprep.subr.bf16.mxu0 %v1061
    %1405 = vmatpush1.bf16.msra.mxu0 %v1060
    %1406 = vmatprep.subr.bf16.mxu0 %v1065
    %1407 = vmatpush1.bf16.msra.mxu0 %v1064
    %1408 = vmatprep.subr.bf16.mxu0 %v1069
    %1409 = vmatpush1.bf16.msra.mxu0 %v1068
    %1410 = vmatprep.subr.bf16.mxu0 %v1073
    %1411 = vmatpush1.bf16.msra.mxu0 %v1072
    %1412 = vmatprep.subr.bf16.mxu0 %v1077
    %1413 = vmatpush1.bf16.msra.mxu0 %v1076
    %1414 = vmatprep.subr.bf16.mxu0 %v1081
    %1415 = vmatpush1.bf16.msra.mxu0 %v1080
    %1416 = vmatprep.subr.bf16.mxu0 %v1085
    %1417 = vmatpush1.bf16.msra.mxu0 %v1084
    %1418 = vmatprep.subr.bf16.mxu0 %v1089
    %1419 = vmatpush1.bf16.msra.mxu0 %v1088
    %1420 = vmatprep.subr.bf16.mxu0 %v1093
    %1421 = vmatpush1.bf16.msra.mxu0 %v1092
    %1422 = vmatprep.subr.bf16.mxu0 %v1097
    %1423 = vmatpush1.bf16.msra.mxu0 %v1096
    %1424 = vmatprep.subr.bf16.mxu0 %v1101
    %1425 = vmatpush1.bf16.msra.mxu0 %v1100
    %1426 = vmatprep.mubr.bf16.mxu0 %v316
    %1427 = vmatmul.mubr.bf16.gmra.mrb[0].mxu0 %v315
    %v1428 = vpop.f32.mrb[0].mxu0
    %v1429 = vadd.f32 %v1386, %v1428
    %v1430 = vpop.f32.mrb[0].mxu0
    %v1431 = vadd.f32 %v1388, %v1430
    %v1432 = vpop.f32.mrb[0].mxu0
    %v1433 = vadd.f32 %v1390, %v1432
    %v1434 = vpop.f32.mrb[0].mxu0
    %v1435 = vadd.f32 %v1392, %v1434
    %1436 = vdwg.mxu0
    %1437 = vmatprep.subr.bf16.mxu0 %v1105
    %1438 = vmatpush1.bf16.msra.mxu0 %v1104
    %1439 = vmatprep.subr.bf16.mxu0 0
    %1440 = vmatpush1.bf16.msra.mxu0 0
    %1441 = vmatprep.subr.bf16.mxu0 0
    %1442 = vmatpush1.bf16.msra.mxu0 0
    %1443 = vmatprep.subr.bf16.mxu0 0
    %1444 = vmatpush1.bf16.msra.mxu0 0
    %1445 = vmatprep.subr.bf16.mxu0 0
    %1446 = vmatpush1.bf16.msra.mxu0 0
    %1447 = vmatprep.subr.bf16.mxu0 0
    %1448 = vmatpush1.bf16.msra.mxu0 0
    %1449 = vmatprep.subr.bf16.mxu0 0
    %1450 = vmatpush1.bf16.msra.mxu0 0
    %1451 = vmatprep.subr.bf16.mxu0 0
    %1452 = vmatpush1.bf16.msra.mxu0 0
    %1453 = vmatprep.subr.bf16.mxu0 0
    %1454 = vmatpush1.bf16.msra.mxu0 0
    %1455 = vmatprep.subr.bf16.mxu0 0
    %1456 = vmatpush1.bf16.msra.mxu0 0
    %1457 = vmatprep.subr.bf16.mxu0 0
    %1458 = vmatpush1.bf16.msra.mxu0 0
    %1459 = vmatprep.subr.bf16.mxu0 0
    %1460 = vmatpush1.bf16.msra.mxu0 0
    %1461 = vmatprep.subr.bf16.mxu0 0
    %1462 = vmatpush1.bf16.msra.mxu0 0
    %1463 = vmatprep.subr.bf16.mxu0 0
    %1464 = vmatpush1.bf16.msra.mxu0 0
    %1465 = vmatprep.subr.bf16.mxu0 0
    %1466 = vmatpush1.bf16.msra.mxu0 0
    %1467 = vmatprep.subr.bf16.mxu0 0
    %1468 = vmatpush1.bf16.msra.mxu0 0
    %1469 = vmatprep.mubr.bf16.mxu0 0
    %1470 = vmatmul.mubr.bf16.gmra.mrb[0].mxu0 %v1306
    %v1471 = vpop.f32.mrb[0].mxu0
    %v1472 = vadd.f32 %v1429, %v1471
    %v1473 = vpop.f32.mrb[0].mxu0
    %v1474 = vadd.f32 %v1431, %v1473
    %v1475 = vpop.f32.mrb[0].mxu0
    %v1476 = vadd.f32 %v1433, %v1475
    %v1477 = vpop.f32.mrb[0].mxu0
    %v1478 = vadd.f32 %v1435, %v1477
    %1479 = vdwg.mxu0
    %1480 = vmatprep.subr.bf16.mxu0 %v915
    %1481 = vmatpush1.bf16.msra.mxu0 %v914
    %1482 = vmatprep.subr.bf16.mxu0 %v919
    %1483 = vmatpush1.bf16.msra.mxu0 %v918
    %1484 = vmatprep.subr.bf16.mxu0 %v923
    %1485 = vmatpush1.bf16.msra.mxu0 %v922
    %1486 = vmatprep.subr.bf16.mxu0 %v927
    %1487 = vmatpush1.bf16.msra.mxu0 %v926
    %1488 = vmatprep.subr.bf16.mxu0 %v931
    %1489 = vmatpush1.bf16.msra.mxu0 %v930
    %1490 = vmatprep.subr.bf16.mxu0 %v935
    %1491 = vmatpush1.bf16.msra.mxu0 %v934
    %1492 = vmatprep.subr.bf16.mxu0 %v939
    %1493 = vmatpush1.bf16.msra.mxu0 %v938
    %1494 = vmatprep.subr.bf16.mxu0 %v943
    %1495 = vmatpush1.bf16.msra.mxu0 %v942
    %1496 = vmatprep.subr.bf16.mxu0 %v947
    %1497 = vmatpush1.bf16.msra.mxu0 %v946
    %1498 = vmatprep.subr.bf16.mxu0 %v951
    %1499 = vmatpush1.bf16.msra.mxu0 %v950
    %1500 = vmatprep.subr.bf16.mxu0 %v955
    %1501 = vmatpush1.bf16.msra.mxu0 %v954
    %1502 = vmatprep.subr.bf16.mxu0 %v959
    %1503 = vmatpush1.bf16.msra.mxu0 %v958
    %1504 = vmatprep.subr.bf16.mxu0 %v963
    %1505 = vmatpush1.bf16.msra.mxu0 %v962
    %1506 = vmatprep.subr.bf16.mxu0 %v967
    %1507 = vmatpush1.bf16.msra.mxu0 %v966
    %1508 = vmatprep.subr.bf16.mxu0 %v971
    %1509 = vmatpush1.bf16.msra.mxu0 %v970
    %1510 = vmatprep.subr.bf16.mxu0 %v975
    %1511 = vmatpush1.bf16.msra.mxu0 %v974
    %1512 = vmatprep.mubr.bf16.mxu0 %v312
    %1513 = vmatmul.mubr.bf16.gmra.mrb[0].mxu0 %v311
    %v1514 = vpop.f32.mrb[0].mxu0
    %v1515 = vadd.f32 %v280, %v1514
    %v1516 = vpop.f32.mrb[0].mxu0
    %v1517 = vadd.f32 %v284, %v1516
    %v1518 = vpop.f32.mrb[0].mxu0
    %v1519 = vadd.f32 %v280, %v1518
    %v1520 = vpop.f32.mrb[0].mxu0
    %v1521 = vadd.f32 %v284, %v1520
    %1522 = vdwg.mxu0
    %1523 = vmatprep.subr.bf16.mxu0 %v979
    %1524 = vmatpush1.bf16.msra.mxu0 %v978
    %1525 = vmatprep.subr.bf16.mxu0 %v983
    %1526 = vmatpush1.bf16.msra.mxu0 %v982
    %1527 = vmatprep.subr.bf16.mxu0 %v987
    %1528 = vmatpush1.bf16.msra.mxu0 %v986
    %1529 = vmatprep.subr.bf16.mxu0 %v991
    %1530 = vmatpush1.bf16.msra.mxu0 %v990
    %1531 = vmatprep.subr.bf16.mxu0 %v995
    %1532 = vmatpush1.bf16.msra.mxu0 %v994
    %1533 = vmatprep.subr.bf16.mxu0 %v999
    %1534 = vmatpush1.bf16.msra.mxu0 %v998
    %1535 = vmatprep.subr.bf16.mxu0 %v1003
    %1536 = vmatpush1.bf16.msra.mxu0 %v1002
    %1537 = vmatprep.subr.bf16.mxu0 %v1007
    %1538 = vmatpush1.bf16.msra.mxu0 %v1006
    %1539 = vmatprep.subr.bf16.mxu0 %v1011
    %1540 = vmatpush1.bf16.msra.mxu0 %v1010
    %1541 = vmatprep.subr.bf16.mxu0 %v1015
    %1542 = vmatpush1.bf16.msra.mxu0 %v1014
    %1543 = vmatprep.subr.bf16.mxu0 %v1019
    %1544 = vmatpush1.bf16.msra.mxu0 %v1018
    %1545 = vmatprep.subr.bf16.mxu0 %v1023
    %1546 = vmatpush1.bf16.msra.mxu0 %v1022
    %1547 = vmatprep.subr.bf16.mxu0 %v1027
    %1548 = vmatpush1.bf16.msra.mxu0 %v1026
    %1549 = vmatprep.subr.bf16.mxu0 %v1031
    %1550 = vmatpush1.bf16.msra.mxu0 %v1030
    %1551 = vmatprep.subr.bf16.mxu0 %v1035
    %1552 = vmatpush1.bf16.msra.mxu0 %v1034
    %1553 = vmatprep.subr.bf16.mxu0 %v1039
    %1554 = vmatpush1.bf16.msra.mxu0 %v1038
    %1555 = vmatprep.mubr.bf16.mxu0 %v314
    %1556 = vmatmul.mubr.bf16.gmra.mrb[0].mxu0 %v313
    %v1557 = vpop.f32.mrb[0].mxu0
    %v1558 = vadd.f32 %v1515, %v1557
    %v1559 = vpop.f32.mrb[0].mxu0
    %v1560 = vadd.f32 %v1517, %v1559
    %v1561 = vpop.f32.mrb[0].mxu0
    %v1562 = vadd.f32 %v1519, %v1561
    %v1563 = vpop.f32.mrb[0].mxu0
    %v1564 = vadd.f32 %v1521, %v1563
    %1565 = vdwg.mxu0
    %1566 = vmatprep.subr.bf16.mxu0 %v1043
    %1567 = vmatpush1.bf16.msra.mxu0 %v1042
    %1568 = vmatprep.subr.bf16.mxu0 %v1047
    %1569 = vmatpush1.bf16.msra.mxu0 %v1046
    %1570 = vmatprep.subr.bf16.mxu0 %v1051
    %1571 = vmatpush1.bf16.msra.mxu0 %v1050
    %1572 = vmatprep.subr.bf16.mxu0 %v1055
    %1573 = vmatpush1.bf16.msra.mxu0 %v1054
    %1574 = vmatprep.subr.bf16.mxu0 %v1059
    %1575 = vmatpush1.bf16.msra.mxu0 %v1058
    %1576 = vmatprep.subr.bf16.mxu0 %v1063
    %1577 = vmatpush1.bf16.msra.mxu0 %v1062
    %1578 = vmatprep.subr.bf16.mxu0 %v1067
    %1579 = vmatpush1.bf16.msra.mxu0 %v1066
    %1580 = vmatprep.subr.bf16.mxu0 %v1071
    %1581 = vmatpush1.bf16.msra.mxu0 %v1070
    %1582 = vmatprep.subr.bf16.mxu0 %v1075
    %1583 = vmatpush1.bf16.msra.mxu0 %v1074
    %1584 = vmatprep.subr.bf16.mxu0 %v1079
    %1585 = vmatpush1.bf16.msra.mxu0 %v1078
    %1586 = vmatprep.subr.bf16.mxu0 %v1083
    %1587 = vmatpush1.bf16.msra.mxu0 %v1082
    %1588 = vmatprep.subr.bf16.mxu0 %v1087
    %1589 = vmatpush1.bf16.msra.mxu0 %v1086
    %1590 = vmatprep.subr.bf16.mxu0 %v1091
    %1591 = vmatpush1.bf16.msra.mxu0 %v1090
    %1592 = vmatprep.subr.bf16.mxu0 %v1095
    %1593 = vmatpush1.bf16.msra.mxu0 %v1094
    %1594 = vmatprep.subr.bf16.mxu0 %v1099
    %1595 = vmatpush1.bf16.msra.mxu0 %v1098
    %1596 = vmatprep.subr.bf16.mxu0 %v1103
    %1597 = vmatpush1.bf16.msra.mxu0 %v1102
    %1598 = vmatprep.mubr.bf16.mxu0 %v316
    %1599 = vmatmul.mubr.bf16.gmra.mrb[0].mxu0 %v315
    %v1600 = vpop.f32.mrb[0].mxu0
    %v1601 = vadd.f32 %v1558, %v1600
    %v1602 = vpop.f32.mrb[0].mxu0
    %v1603 = vadd.f32 %v1560, %v1602
    %v1604 = vpop.f32.mrb[0].mxu0
    %v1605 = vadd.f32 %v1562, %v1604
    %v1606 = vpop.f32.mrb[0].mxu0
    %v1607 = vadd.f32 %v1564, %v1606
    %1608 = vdwg.mxu0
    %1609 = vmatprep.subr.bf16.mxu0 %v1107
    %1610 = vmatpush1.bf16.msra.mxu0 %v1106
    %1611 = vmatprep.subr.bf16.mxu0 0
    %1612 = vmatpush1.bf16.msra.mxu0 0
    %1613 = vmatprep.subr.bf16.mxu0 0
    %1614 = vmatpush1.bf16.msra.mxu0 0
    %1615 = vmatprep.subr.bf16.mxu0 0
    %1616 = vmatpush1.bf16.msra.mxu0 0
    %1617 = vmatprep.subr.bf16.mxu0 0
    %1618 = vmatpush1.bf16.msra.mxu0 0
    %1619 = vmatprep.subr.bf16.mxu0 0
    %1620 = vmatpush1.bf16.msra.mxu0 0
    %1621 = vmatprep.subr.bf16.mxu0 0
    %1622 = vmatpush1.bf16.msra.mxu0 0
    %1623 = vmatprep.subr.bf16.mxu0 0
    %1624 = vmatpush1.bf16.msra.mxu0 0
    %1625 = vmatprep.subr.bf16.mxu0 0
    %1626 = vmatpush1.bf16.msra.mxu0 0
    %1627 = vmatprep.subr.bf16.mxu0 0
    %1628 = vmatpush1.bf16.msra.mxu0 0
    %1629 = vmatprep.subr.bf16.mxu0 0
    %1630 = vmatpush1.bf16.msra.mxu0 0
    %1631 = vmatprep.subr.bf16.mxu0 0
    %1632 = vmatpush1.bf16.msra.mxu0 0
    %1633 = vmatprep.subr.bf16.mxu0 0
    %1634 = vmatpush1.bf16.msra.mxu0 0
    %1635 = vmatprep.subr.bf16.mxu0 0
    %1636 = vmatpush1.bf16.msra.mxu0 0
    %1637 = vmatprep.subr.bf16.mxu0 0
    %1638 = vmatpush1.bf16.msra.mxu0 0
    %1639 = vmatprep.subr.bf16.mxu0 0
    %1640 = vmatpush1.bf16.msra.mxu0 0
    %1641 = vmatprep.mubr.bf16.mxu0 0
    %1642 = vmatmul.mubr.bf16.gmra.mrb[0].mxu0 %v1306
    %v1643 = vpop.f32.mrb[0].mxu0
    %v1644 = vadd.f32 %v1601, %v1643
    %v1645 = vpop.f32.mrb[0].mxu0
    %v1646 = vadd.f32 %v1603, %v1645
    %v1647 = vpop.f32.mrb[0].mxu0
    %v1648 = vadd.f32 %v1605, %v1647
    %v1649 = vpop.f32.mrb[0].mxu0
    %v1650 = vadd.f32 %v1607, %v1649
    %1651 = vdwg.mxu0
    %v1652 = vmax.f32 %v1472, 0.0
    %v1653 = vmax.f32 %v1474, 0.0
    %v1654 = vmax.f32 %v1644, 0.0
    %v1655 = vmax.f32 %v1646, 0.0
    %v1656 = vmax.f32 %v1476, 0.0
    %v1657 = vmax.f32 %v1478, 0.0
    %v1658 = vmax.f32 %v1648, 0.0
    %v1659 = vmax.f32 %v1650, 0.0
    %v1660 = vpack.c.bf16 %v1656, %v1652
    %v1661 = vpack.c.bf16 %v1657, %v1653
    %v1662 = vpack.c.bf16 %v1658, %v1654
    %v1663 = vpack.c.bf16 %v1659, %v1655
    %v1664 = vld [vmem:[#allocation7] sm:$0xf]
    %v1665 = vld [vmem:[#allocation7 + $0x4] sm:$0xf]
    %v1666 = vld [vmem:[#allocation7 + $0x8] sm:$0xf]
    %v1667 = vld [vmem:[#allocation7 + $0xc] sm:$0xf]
    %v1668 = vld [vmem:[#allocation7 + $0x10] sm:$0xf]
    %v1669 = vld [vmem:[#allocation7 + $0x14] sm:$0xf]
    %v1670 = vld [vmem:[#allocation7 + $0x18] sm:$0xf]
    %v1671 = vld [vmem:[#allocation7 + $0x1c] sm:$0xf]
    %v1672 = vld [vmem:[#allocation7 + $0x20] sm:$0xf]
    %v1673 = vld [vmem:[#allocation7 + $0x24] sm:$0xf]
    %v1674 = vld [vmem:[#allocation7 + $0x28] sm:$0xf]
    %v1675 = vld [vmem:[#allocation7 + $0x2c] sm:$0xf]
    %v1676 = vld [vmem:[#allocation7 + $0x30] sm:$0xf]
    %v1677 = vld [vmem:[#allocation7 + $0x34] sm:$0xf]
    %v1678 = vld [vmem:[#allocation7 + $0x38] sm:$0xf]
    %v1679 = vld [vmem:[#allocation7 + $0x3c] sm:$0xf]
    %v1680 = vld [vmem:[#allocation7 + $0x40] sm:$0xf]
    %v1681 = vld [vmem:[#allocation7 + $0x44] sm:$0xf]
    %v1682 = vld [vmem:[#allocation7 + $0x48] sm:$0xf]
    %v1683 = vld [vmem:[#allocation7 + $0x4c] sm:$0xf]
    %v1684 = vld [vmem:[#allocation7 + $0x50] sm:$0xf]
    %v1685 = vld [vmem:[#allocation7 + $0x54] sm:$0xf]
    %v1686 = vld [vmem:[#allocation7 + $0x58] sm:$0xf]
    %v1687 = vld [vmem:[#allocation7 + $0x5c] sm:$0xf]
    %v1688 = vld [vmem:[#allocation7 + $0x60] sm:$0xf]
    %v1689 = vld [vmem:[#allocation7 + $0x64] sm:$0xf]
    %v1690 = vld [vmem:[#allocation7 + $0x68] sm:$0xf]
    %v1691 = vld [vmem:[#allocation7 + $0x6c] sm:$0xf]
    %v1692 = vld [vmem:[#allocation7 + $0x70] sm:$0xf]
    %v1693 = vld [vmem:[#allocation7 + $0x74] sm:$0xf]
    %v1694 = vld [vmem:[#allocation7 + $0x78] sm:$0xf]
    %v1695 = vld [vmem:[#allocation7 + $0x7c] sm:$0xf]
    %v1696 = vld [vmem:[#allocation7 + $0x80] sm:$0xf]
    %v1697 = vld [vmem:[#allocation7 + $0x84] sm:$0xf]
    %v1698 = vld [vmem:[#allocation7 + $0x88] sm:$0xf]
    %v1699 = vld [vmem:[#allocation7 + $0x8c] sm:$0xf]
    %v1700 = vld [vmem:[#allocation7 + $0x90] sm:$0xf]
    %v1701 = vld [vmem:[#allocation7 + $0x94] sm:$0xf]
    %v1702 = vld [vmem:[#allocation7 + $0x98] sm:$0xf]
    %v1703 = vld [vmem:[#allocation7 + $0x9c] sm:$0xf]
    %v1704 = vld [vmem:[#allocation7 + $0xa0] sm:$0xf]
    %v1705 = vld [vmem:[#allocation7 + $0xa4] sm:$0xf]
    %v1706 = vld [vmem:[#allocation7 + $0xa8] sm:$0xf]
    %v1707 = vld [vmem:[#allocation7 + $0xac] sm:$0xf]
    %v1708 = vld [vmem:[#allocation7 + $0xb0] sm:$0xf]
    %v1709 = vld [vmem:[#allocation7 + $0xb4] sm:$0xf]
    %v1710 = vld [vmem:[#allocation7 + $0xb8] sm:$0xf]
    %v1711 = vld [vmem:[#allocation7 + $0xbc] sm:$0xf]
    %v1712 = vld [vmem:[#allocation7 + $0xc0] sm:$0xf]
    %v1713 = vld [vmem:[#allocation7 + $0xc4] sm:$0xf]
    %v1714 = vld [vmem:[#allocation7 + $0xc8] sm:$0xf]
    %v1715 = vld [vmem:[#allocation7 + $0xcc] sm:$0xf]
    %v1716 = vld [vmem:[#allocation7 + $0xd0] sm:$0xf]
    %v1717 = vld [vmem:[#allocation7 + $0xd4] sm:$0xf]
    %v1718 = vld [vmem:[#allocation7 + $0xd8] sm:$0xf]
    %v1719 = vld [vmem:[#allocation7 + $0xdc] sm:$0xf]
    %v1720 = vld [vmem:[#allocation7 + $0xe0] sm:$0xf]
    %v1721 = vld [vmem:[#allocation7 + $0xe4] sm:$0xf]
    %v1722 = vld [vmem:[#allocation7 + $0xe8] sm:$0xf]
    %v1723 = vld [vmem:[#allocation7 + $0xec] sm:$0xf]
    %v1724 = vld [vmem:[#allocation7 + $0xf0] sm:$0xf]
    %v1725 = vld [vmem:[#allocation7 + $0xf4] sm:$0xf]
    %v1726 = vld [vmem:[#allocation7 + $0xf8] sm:$0xf]
    %v1727 = vld [vmem:[#allocation7 + $0xfc] sm:$0xf]
    %v1728 = vld [vmem:[%s4] sm:$0x1]
    %v1730 = vlaneseq
    %v1731 = vshrl.u32 %v1730, 7
    %v1732 = vsub.s32 0, %v1731
    %v1733 = vrot.slane %v1728, %v1732
    %v1799 = vunpack.c.l.b16 %v1664
    %v1800 = vunpack.c.l.b16 %v1665
    %v1801 = vunpack.c.l.b16 %v1666
    %v1802 = vunpack.c.l.b16 %v1667
    %v1803 = vunpack.c.l.b16 %v1668
    %v1804 = vunpack.c.l.b16 %v1669
    %v1805 = vunpack.c.l.b16 %v1670
    %v1806 = vunpack.c.l.b16 %v1671
    %v1807 = vunpack.c.l.b16 %v1672
    %v1808 = vunpack.c.l.b16 %v1673
    %v1809 = vunpack.c.l.b16 %v1674
    %v1810 = vunpack.c.l.b16 %v1675
    %v1811 = vunpack.c.l.b16 %v1676
    %v1812 = vunpack.c.l.b16 %v1677
    %v1813 = vunpack.c.l.b16 %v1678
    %v1814 = vunpack.c.l.b16 %v1679
    %v1815 = vunpack.c.l.b16 %v1680
    %v1816 = vunpack.c.l.b16 %v1681
    %v1817 = vunpack.c.l.b16 %v1682
    %v1818 = vunpack.c.l.b16 %v1683
    %v1819 = vunpack.c.l.b16 %v1684
    %v1820 = vunpack.c.l.b16 %v1685
    %v1821 = vunpack.c.l.b16 %v1686
    %v1822 = vunpack.c.l.b16 %v1687
    %v1823 = vunpack.c.l.b16 %v1688
    %v1824 = vunpack.c.l.b16 %v1689
    %v1825 = vunpack.c.l.b16 %v1690
    %v1826 = vunpack.c.l.b16 %v1691
    %v1827 = vunpack.c.l.b16 %v1692
    %v1828 = vunpack.c.l.b16 %v1693
    %v1829 = vunpack.c.l.b16 %v1694
    %v1830 = vunpack.c.l.b16 %v1695
    %v1831 = vunpack.c.l.b16 %v1696
    %v1832 = vunpack.c.l.b16 %v1697
    %v1833 = vunpack.c.l.b16 %v1698
    %v1834 = vunpack.c.l.b16 %v1699
    %v1835 = vunpack.c.l.b16 %v1700
    %v1836 = vunpack.c.l.b16 %v1701
    %v1837 = vunpack.c.l.b16 %v1702
    %v1838 = vunpack.c.l.b16 %v1703
    %v1839 = vunpack.c.l.b16 %v1704
    %v1840 = vunpack.c.l.b16 %v1705
    %v1841 = vunpack.c.l.b16 %v1706
    %v1842 = vunpack.c.l.b16 %v1707
    %v1843 = vunpack.c.l.b16 %v1708
    %v1844 = vunpack.c.l.b16 %v1709
    %v1845 = vunpack.c.l.b16 %v1710
    %v1846 = vunpack.c.l.b16 %v1711
    %v1847 = vunpack.c.l.b16 %v1712
    %v1848 = vunpack.c.l.b16 %v1713
    %v1849 = vunpack.c.l.b16 %v1714
    %v1850 = vunpack.c.l.b16 %v1715
    %v1851 = vunpack.c.l.b16 %v1716
    %v1852 = vunpack.c.l.b16 %v1717
    %v1853 = vunpack.c.l.b16 %v1718
    %v1854 = vunpack.c.l.b16 %v1719
    %v1855 = vunpack.c.l.b16 %v1720
    %v1856 = vunpack.c.l.b16 %v1721
    %v1857 = vunpack.c.l.b16 %v1722
    %v1858 = vunpack.c.l.b16 %v1723
    %v1859 = vunpack.c.l.b16 %v1724
    %v1860 = vunpack.c.l.b16 %v1725
    %v1861 = vunpack.c.l.b16 %v1726
    %v1862 = vunpack.c.l.b16 %v1727
    %v1863 = vpack.c.b16 %v1800, %v1799
    %v1864 = vpack.c.b16 %v1802, %v1801
    %v1865 = vpack.c.b16 %v1804, %v1803
    %v1866 = vpack.c.b16 %v1806, %v1805
    %v1867 = vpack.c.b16 %v1808, %v1807
    %v1868 = vpack.c.b16 %v1810, %v1809
    %v1869 = vpack.c.b16 %v1812, %v1811
    %v1870 = vpack.c.b16 %v1814, %v1813
    %v1871 = vpack.c.b16 %v1816, %v1815
    %v1872 = vpack.c.b16 %v1818, %v1817
    %v1873 = vpack.c.b16 %v1820, %v1819
    %v1874 = vpack.c.b16 %v1822, %v1821
    %v1875 = vpack.c.b16 %v1824, %v1823
    %v1876 = vpack.c.b16 %v1826, %v1825
    %v1877 = vpack.c.b16 %v1828, %v1827
    %v1878 = vpack.c.b16 %v1830, %v1829
    %v1879 = vpack.c.b16 %v1832, %v1831
    %v1880 = vpack.c.b16 %v1834, %v1833
    %v1881 = vpack.c.b16 %v1836, %v1835
    %v1882 = vpack.c.b16 %v1838, %v1837
    %v1883 = vpack.c.b16 %v1840, %v1839
    %v1884 = vpack.c.b16 %v1842, %v1841
    %v1885 = vpack.c.b16 %v1844, %v1843
    %v1886 = vpack.c.b16 %v1846, %v1845
    %v1887 = vpack.c.b16 %v1848, %v1847
    %v1888 = vpack.c.b16 %v1850, %v1849
    %v1889 = vpack.c.b16 %v1852, %v1851
    %v1890 = vpack.c.b16 %v1854, %v1853
    %v1891 = vpack.c.b16 %v1856, %v1855
    %v1892 = vpack.c.b16 %v1858, %v1857
    %v1893 = vpack.c.b16 %v1860, %v1859
    %v1894 = vpack.c.b16 %v1862, %v1861
    %1927 = vmatprep.subr.bf16.mxu0 0
    %1928 = vmatpush1.bf16.msra.mxu0 %v1863
    %1929 = vmatprep.subr.bf16.mxu0 0
    %1930 = vmatpush1.bf16.msra.mxu0 %v1864
    %1931 = vmatprep.subr.bf16.mxu0 0
    %1932 = vmatpush1.bf16.msra.mxu0 %v1865
    %1933 = vmatprep.subr.bf16.mxu0 0
    %1934 = vmatpush1.bf16.msra.mxu0 %v1866
    %1935 = vmatprep.subr.bf16.mxu0 0
    %1936 = vmatpush1.bf16.msra.mxu0 %v1867
    %1937 = vmatprep.subr.bf16.mxu0 0
    %1938 = vmatpush1.bf16.msra.mxu0 %v1868
    %1939 = vmatprep.subr.bf16.mxu0 0
    %1940 = vmatpush1.bf16.msra.mxu0 %v1869
    %1941 = vmatprep.subr.bf16.mxu0 0
    %1942 = vmatpush1.bf16.msra.mxu0 %v1870
    %1943 = vmatprep.subr.bf16.mxu0 0
    %1944 = vmatpush1.bf16.msra.mxu0 %v1871
    %1945 = vmatprep.subr.bf16.mxu0 0
    %1946 = vmatpush1.bf16.msra.mxu0 %v1872
    %1947 = vmatprep.subr.bf16.mxu0 0
    %1948 = vmatpush1.bf16.msra.mxu0 %v1873
    %1949 = vmatprep.subr.bf16.mxu0 0
    %1950 = vmatpush1.bf16.msra.mxu0 %v1874
    %1951 = vmatprep.subr.bf16.mxu0 0
    %1952 = vmatpush1.bf16.msra.mxu0 %v1875
    %1953 = vmatprep.subr.bf16.mxu0 0
    %1954 = vmatpush1.bf16.msra.mxu0 %v1876
    %1955 = vmatprep.subr.bf16.mxu0 0
    %1956 = vmatpush1.bf16.msra.mxu0 %v1877
    %1957 = vmatprep.subr.bf16.mxu0 0
    %1958 = vmatpush1.bf16.msra.mxu0 %v1878
    %1959 = vmatprep.mubr.bf16.mxu0 %v1661
    %1960 = vmatmul.mubr.bf16.gmra.mrb[0].mxu0 %v1660
    %v1961 = vpop.f32.mrb[0].mxu0
    %v1962 = vadd.f32 %v1733, %v1961
    %v1963 = vpop.f32.mrb[0].mxu0
    %v1964 = vpop.f32.mrb[0].mxu0
    %v1965 = vadd.f32 %v1733, %v1964
    %v1966 = vpop.f32.mrb[0].mxu0
    %1967 = vdwg.mxu0
    %1968 = vmatprep.subr.bf16.mxu0 0
    %1969 = vmatpush1.bf16.msra.mxu0 %v1879
    %1970 = vmatprep.subr.bf16.mxu0 0
    %1971 = vmatpush1.bf16.msra.mxu0 %v1880
    %1972 = vmatprep.subr.bf16.mxu0 0
    %1973 = vmatpush1.bf16.msra.mxu0 %v1881
    %1974 = vmatprep.subr.bf16.mxu0 0
    %1975 = vmatpush1.bf16.msra.mxu0 %v1882
    %1976 = vmatprep.subr.bf16.mxu0 0
    %1977 = vmatpush1.bf16.msra.mxu0 %v1883
    %1978 = vmatprep.subr.bf16.mxu0 0
    %1979 = vmatpush1.bf16.msra.mxu0 %v1884
    %1980 = vmatprep.subr.bf16.mxu0 0
    %1981 = vmatpush1.bf16.msra.mxu0 %v1885
    %1982 = vmatprep.subr.bf16.mxu0 0
    %1983 = vmatpush1.bf16.msra.mxu0 %v1886
    %1984 = vmatprep.subr.bf16.mxu0 0
    %1985 = vmatpush1.bf16.msra.mxu0 %v1887
    %1986 = vmatprep.subr.bf16.mxu0 0
    %1987 = vmatpush1.bf16.msra.mxu0 %v1888
    %1988 = vmatprep.subr.bf16.mxu0 0
    %1989 = vmatpush1.bf16.msra.mxu0 %v1889
    %1990 = vmatprep.subr.bf16.mxu0 0
    %1991 = vmatpush1.bf16.msra.mxu0 %v1890
    %1992 = vmatprep.subr.bf16.mxu0 0
    %1993 = vmatpush1.bf16.msra.mxu0 %v1891
    %1994 = vmatprep.subr.bf16.mxu0 0
    %1995 = vmatpush1.bf16.msra.mxu0 %v1892
    %1996 = vmatprep.subr.bf16.mxu0 0
    %1997 = vmatpush1.bf16.msra.mxu0 %v1893
    %1998 = vmatprep.subr.bf16.mxu0 0
    %1999 = vmatpush1.bf16.msra.mxu0 %v1894
    %2000 = vmatprep.mubr.bf16.mxu0 %v1663
    %2001 = vmatmul.mubr.bf16.gmra.mrb[0].mxu0 %v1662
    %v2002 = vpop.f32.mrb[0].mxu0
    %v2003 = vadd.f32 %v1962, %v2002
    %v2004 = vpop.f32.mrb[0].mxu0
    %v2005 = vpop.f32.mrb[0].mxu0
    %v2006 = vadd.f32 %v1965, %v2005
    %v2007 = vpop.f32.mrb[0].mxu0
    %2008 = vdwg.mxu0
    %2009 = vst [vmem:[#allocation8] sm:$0xff] %v2003
    %2010 = vst [vmem:[#allocation8 + $0x8] sm:$0xff] %v2006
    // Predicated region
    $region34: #{tpu_custom_call.1} parent=1 // pred_check
      _
    $region35: #{tpu_custom_call.1} parent=1 // pred_check_branch
      %2012 = sbr.rel (0) target = $region37
    $region36: #{tpu_custom_call.1} parent=1 // pred_region
      %s2014 = ssub.s32 256, 128
      %2015 = vsyncadd [#allocation4], %s2014
      %s2016 = sshll.u32 [#allocation8], 4
      %s2017 = int_to_ptr.vmem [resolvable:$true] %s2016
      %2022 = dma.vmem_to_hbm [thread:$0]  %s2017, 128, %s5, [#allocation4], 128, 128, 8
    $region37: #{tpu_custom_call.1} parent=1 // pred_fallthru
      _
    // Predicated region
    $region38: #{tpu_custom_call.1} parent=1 // pred_check
      _
    $region39: #{tpu_custom_call.1} parent=1 // pred_check_branch
      %2024 = sbr.rel (0) target = $region41
    $region40: #{tpu_custom_call.1} parent=1 // pred_region
      %2025 = dma.done [#allocation4], 256
    $region41: #{tpu_custom_call.1} parent=1 // pred_fallthru
      _
    %2026 = vsyncpa [#allocation3], 1
    %2027 = vsyncpa [#allocation6], 1
    %2028 = vsyncpa [#allocation4], 1

</llo_original>
